<compile_context>
chip_gen: v6e
topology: v6e:2x2x1
jax: 0.10.0
libtpu: 0.0.40
codegen_flags: <defaults>
</compile_context>

<pallas_src>
import functools
import math

import jax
import jax.numpy as jnp
from jax.experimental import pallas as pl
from jax.experimental.pallas import tpu as pltpu

LANE = 128


def _round_up(x, m):
    return ((x + m - 1) // m) * m


# --------------------------------------------------------------------------
# Kernels
# --------------------------------------------------------------------------

def feature_transform_kernel(x_ref, w_ref, o_ref):
    """support_row_tile = x_row_tile @ W   (f32 accumulate on the MXU)."""
    o_ref[...] = jnp.dot(
        x_ref[...], w_ref[...], preferred_element_type=jnp.float32
    ).astype(o_ref.dtype)


def aggregate_kernel(*refs, apply_relu, fuse_w2):
    """out_row_tile = [relu](adj_row_tile @ support + b) [@ W2]

    grid = (row_tiles, k_tiles).  The reduction (k) axis accumulates into a
    resident f32 VMEM scratch; the epilogue (bias, relu, optional fused W2
    matmul, store) runs only on the last k step.
    """
    if fuse_w2:
        adj_ref, s_ref, b_ref, w2_ref, o_ref, acc_ref = refs
    else:
        adj_ref, s_ref, b_ref, o_ref, acc_ref = refs
        w2_ref = None

    k = pl.program_id(1)

    @pl.when(k == 0)
    def _():
        acc_ref[...] = jnp.zeros_like(acc_ref)

    acc_ref[...] += jnp.dot(
        adj_ref[...], s_ref[...], preferred_element_type=jnp.float32
    )

    @pl.when(k == pl.num_programs(1) - 1)
    def _():
        out = acc_ref[...] + b_ref[...]
        if apply_relu:
            out = jnp.maximum(out, 0.0)
        if fuse_w2:
            out = jnp.dot(
                out.astype(w2_ref.dtype), w2_ref[...],
                preferred_element_type=jnp.float32,
            )
        o_ref[...] = out.astype(o_ref.dtype)


# --------------------------------------------------------------------------
# pallas_call wrappers
# --------------------------------------------------------------------------

def feature_transform(x, w, *, tm, out_dtype):
    """support = x @ w, row-tiled.  x: [Np, F] bf16, w: [F, Hp] bf16."""
    n, f = x.shape
    hp = w.shape[1]
    flops = 2 * n * f * hp
    bytes_accessed = (x.size * x.dtype.itemsize + w.size * w.dtype.itemsize
                      + n * hp * jnp.dtype(out_dtype).itemsize)
    return pl.pallas_call(
        feature_transform_kernel,
        out_shape=jax.ShapeDtypeStruct((n, hp), out_dtype),
        grid_spec=pltpu.PrefetchScalarGridSpec(
            num_scalar_prefetch=0,
            grid=(n // tm,),
            in_specs=[
                pl.BlockSpec((tm, f), lambda i: (i, 0)),
                pl.BlockSpec((f, hp), lambda i: (0, 0)),   # W resident
            ],
            out_specs=pl.BlockSpec((tm, hp), lambda i: (i, 0)),
        ),
        compiler_params=pltpu.CompilerParams(
            dimension_semantics=("parallel",)),
        cost_estimate=pl.CostEstimate(
            flops=flops, transcendentals=0, bytes_accessed=bytes_accessed),
    )(x, w)


def aggregate(adj, support, bias, post_weight=None, *,
              apply_relu, tm, tk, out_dtype):
    """out = [relu](adj @ support + bias) [@ post_weight], tiled + pipelined.

    adj: [Np, Np] bf16, support: [Np, Hp] bf16, bias: [1, Hp] f32,
    post_weight (optional): [Hp, Op] bf16.
    """
    n = adj.shape[0]
    hp = support.shape[1]
    op = post_weight.shape[1] if post_weight is not None else hp

    in_specs = [
        pl.BlockSpec((tm, tk), lambda i, k: (i, k)),   # adjacency tile
        pl.BlockSpec((tk, hp), lambda i, k: (k, 0)),   # support k-block
        pl.BlockSpec((1, hp), lambda i, k: (0, 0)),    # bias (resident)
    ]
    args = [adj, support, bias]
    if post_weight is not None:
        in_specs.append(pl.BlockSpec((hp, op), lambda i, k: (0, 0)))
        args.append(post_weight)

    kernel = functools.partial(
        aggregate_kernel,
        apply_relu=apply_relu,
        fuse_w2=post_weight is not None)

    flops = 2 * n * n * hp + (2 * n * hp * op if post_weight is not None else 0)
    bytes_accessed = (adj.size * adj.dtype.itemsize
                      + support.size * support.dtype.itemsize
                      + n * op * jnp.dtype(out_dtype).itemsize)

    return pl.pallas_call(
        kernel,
        out_shape=jax.ShapeDtypeStruct((n, op), out_dtype),
        grid_spec=pltpu.PrefetchScalarGridSpec(
            num_scalar_prefetch=0,
            grid=(n // tm, n // tk),                   # reduction axis last
            in_specs=in_specs,
            out_specs=pl.BlockSpec((tm, op), lambda i, k: (i, 0)),
            scratch_shapes=[pltpu.VMEM((tm, hp), jnp.float32)],
        ),
        compiler_params=pltpu.CompilerParams(
            dimension_semantics=("parallel", "arbitrary")),
        cost_estimate=pl.CostEstimate(
            flops=flops, transcendentals=0, bytes_accessed=bytes_accessed),
    )(*args)


# --------------------------------------------------------------------------
# GCN forward
# --------------------------------------------------------------------------

def gcn_forward(adjacency, features, params, *, hidden_dim, output_dim,
                tm=256, tk=512):
    """relu(adj @ (x @ W1) + b1) -> adj @ (h @ W2) + b2."""
    w1, b1, w2, b2 = params
    n, f_in = features.shape

    # Tile sizes: clamp to the (128-rounded) node count, then pad N so it
    # divides both tiles.  Padded adjacency rows/cols are zero, so padded
    # rows of intermediates never contribute to real outputs.
    np128 = _round_up(n, LANE)
    tm = min(tm, np128)
    tk = min(tk, np128)
    lcm = tm * tk // math.gcd(tm, tk)
    n_pad = _round_up(n, lcm)

    # Pad hidden / output widths to lane-dense multiples of 128.
    hp = _round_up(hidden_dim, LANE)
    op = _round_up(output_dim, LANE)

    # bf16 streaming operands; f32 bias (added to the f32 accumulator).
    adj_p = jnp.zeros((n_pad, n_pad), jnp.bfloat16).at[:n, :n].set(
        adjacency.astype(jnp.bfloat16))
    x_p = jnp.zeros((n_pad, f_in), jnp.bfloat16).at[:n, :].set(
        features.astype(jnp.bfloat16))
    w1_p = jnp.zeros((f_in, hp), jnp.bfloat16).at[:, :hidden_dim].set(
        w1.astype(jnp.bfloat16))
    b1_p = jnp.zeros((1, hp), jnp.float32).at[:, :hidden_dim].set(
        b1.reshape(1, -1).astype(jnp.float32))
    w2_p = jnp.zeros((hp, op), jnp.bfloat16).at[:hidden_dim, :output_dim].set(
        w2.astype(jnp.bfloat16))
    b2_p = jnp.zeros((1, op), jnp.float32).at[:, :output_dim].set(
        b2.reshape(1, -1).astype(jnp.float32))

    # Layer 1 feature transform: support1 = x @ W1          [n_pad, hp]
    support1 = feature_transform(x_p, w1_p, tm=tm, out_dtype=jnp.bfloat16)

    # Layer 1 aggregation fused with layer 2's feature transform:
    #   t = relu(adj @ support1 + b1) @ W2                  [n_pad, op]
    t = aggregate(adj_p, support1, b1_p, w2_p,
                  apply_relu=True, tm=tm, tk=tk, out_dtype=jnp.bfloat16)

    # Layer 2 aggregation: out = adj @ t + b2               [n_pad, op]
    out_p = aggregate(adj_p, t, b2_p, None,
                      apply_relu=False, tm=tm, tk=tk, out_dtype=jnp.float32)

    return out_p[:n, :output_dim]


def init_params(key, input_dim, hidden_dim, output_dim):
    """Deterministic Glorot-uniform-style init (matches nn.Parameter shapes)."""
    k1, k2 = jax.random.split(key)

    def glorot(k, fan_in, fan_out):
        limit = jnp.sqrt(6.0 / (fan_in + fan_out))
        return jax.random.uniform(
            k, (fan_in, fan_out), jnp.float32, -limit, limit)

    w1 = glorot(k1, input_dim, hidden_dim)
    b1 = jnp.zeros((hidden_dim,), jnp.float32)
    w2 = glorot(k2, hidden_dim, output_dim)
    b2 = jnp.zeros((output_dim,), jnp.float32)
    return w1, b1, w2, b2


if __name__ == "__main__":
    # Small synthetic shapes consistent with the module's forward:
    #   N nodes, input_dim features, hidden_dim=16, 7 output classes.
    N = 128
    INPUT_DIM = 64
    HIDDEN_DIM = 16
    OUTPUT_DIM = 7

    key = jax.random.PRNGKey(0)
    k_adj, k_feat, k_param = jax.random.split(key, 3)

    # Dense "normalized adjacency": random sparse-ish mask + self-loops,
    # symmetrically normalized (D^-1/2 A D^-1/2).
    raw = jax.random.uniform(k_adj, (N, N), jnp.float32)
    mask = (raw > 0.9).astype(jnp.float32)
    a = mask + mask.T + jnp.eye(N, dtype=jnp.float32)
    a = jnp.minimum(a, 1.0)
    deg = jnp.sum(a, axis=1)
    d_inv_sqrt = 1.0 / jnp.sqrt(deg)
    adjacency = a * d_inv_sqrt[:, None] * d_inv_sqrt[None, :]

    features = jax.random.normal(k_feat, (N, INPUT_DIM), jnp.float32)
    params = init_params(k_param, INPUT_DIM, HIDDEN_DIM, OUTPUT_DIM)

    fwd = jax.jit(functools.partial(
        gcn_forward, hidden_dim=HIDDEN_DIM, output_dim=OUTPUT_DIM))
    out = fwd(adjacency, features, params)
    out = jax.block_until_ready(out)

    # Pure-f32 JAX reference; tolerance relaxed for bf16 streaming operands.
    w1, b1, w2, b2 = params
    h_ref = jnp.maximum(adjacency @ (features @ w1) + b1[None, :], 0.0)
    out_ref = adjacency @ (h_ref @ w2) + b2[None, :]

    assert out.shape == (N, OUTPUT_DIM)
    max_err = float(jnp.max(jnp.abs(out - out_ref)))
    assert jnp.allclose(out, out_ref, atol=2e-2, rtol=5e-2), max_err

    print("KERNEL_OK")
</pallas_src>

<mosaic_0001>
module attributes {stable_mosaic.version = 11 : i64} {
  func.func @feature_transform_kernel(%arg0: i32, %arg1: memref<128x64xbf16, #tpu.memory_space<vmem>>, %arg2: memref<64x128xbf16, #tpu.memory_space<vmem>>, %arg3: memref<128x128xbf16, #tpu.memory_space<vmem>>) attributes {dimension_semantics = [#tpu.dimension_semantics<parallel>], iteration_bounds = array<i64: 1>, scalar_prefetch = 0 : i64, scratch_operands = 0 : i64, tpu.core_type = #tpu.core_type<tc>, window_params = [{transform_indices = @transform_0, window_bounds = array<i64: 128, 64>}, {pipeline_mode = #tpu.pipeline_mode<synchronous>, transform_indices = @transform_1, window_bounds = array<i64: 64, 128>}, {transform_indices = @transform_2, window_bounds = array<i64: 128, 128>}]} {
    %c0 = arith.constant 0 : index
    %c0_0 = arith.constant 0 : index
    %0 = vector.load %arg1[%c0, %c0_0] : memref<128x64xbf16, #tpu.memory_space<vmem>>, vector<128x64xbf16>
    %c0_1 = arith.constant 0 : index
    %c0_2 = arith.constant 0 : index
    %1 = vector.load %arg2[%c0_1, %c0_2] : memref<64x128xbf16, #tpu.memory_space<vmem>>, vector<64x128xbf16>
    %cst = arith.constant dense<0.000000e+00> : vector<128x128xf32>
    %2 = tpu.matmul %0, %1, %cst {dimension_numbers = #tpu.dot_dimension_numbers<[1], [0], [0], [1], [0, 0, 1, 1], [], []>} : vector<128x64xbf16>, vector<64x128xbf16>, vector<128x128xf32> -> vector<128x128xf32>
    %3 = arith.truncf %2 : vector<128x128xf32> to vector<128x128xbf16>
    %c0_3 = arith.constant 0 : index
    %c0_4 = arith.constant 0 : index
    %4 = vector.load %arg3[%c0_3, %c0_4] : memref<128x128xbf16, #tpu.memory_space<vmem>>, vector<128x128xbf16>
    tpu.vector_store %arg3[%c0_3, %c0_4], %3 {strides = array<i32>} : memref<128x128xbf16, #tpu.memory_space<vmem>>, vector<128x128xbf16>,
    return
  }
  func.func @transform_0(%arg0: i32) -> (i32, i32) {
    %c0_i32 = arith.constant 0 : i32
    %c0_i32_0 = arith.constant 0 : i32
    return %arg0, %c0_i32 : i32, i32
  }
  func.func @transform_1(%arg0: i32) -> (i32, i32) {
    %c0_i32 = arith.constant 0 : i32
    %c0_i32_0 = arith.constant 0 : i32
    %c0_i32_1 = arith.constant 0 : i32
    return %c0_i32, %c0_i32_0 : i32, i32
  }
  func.func @transform_2(%arg0: i32) -> (i32, i32) {
    %c0_i32 = arith.constant 0 : i32
    %c0_i32_0 = arith.constant 0 : i32
    return %arg0, %c0_i32 : i32, i32
  }
}

module attributes {stable_mosaic.version = 11 : i64} {
  func.func @aggregate_kernel(%arg0: i32, %arg1: i32, %arg2: memref<128x128xbf16, #tpu.memory_space<vmem>>, %arg3: memref<128x128xbf16, #tpu.memory_space<vmem>>, %arg4: memref<1x128xf32, #tpu.memory_space<vmem>>, %arg5: memref<128x128xf32, #tpu.memory_space<vmem>>, %arg6: memref<128x128xf32, #tpu.memory_space<vmem>>) attributes {dimension_semantics = [#tpu.dimension_semantics<parallel>, #tpu.dimension_semantics<arbitrary>], iteration_bounds = array<i64: 1, 1>, scalar_prefetch = 0 : i64, scratch_operands = 1 : i64, tpu.core_type = #tpu.core_type<tc>, window_params = [{transform_indices = @transform_0, window_bounds = array<i64: 128, 128>}, {transform_indices = @transform_1, window_bounds = array<i64: 128, 128>}, {pipeline_mode = #tpu.pipeline_mode<synchronous>, transform_indices = @transform_2, window_bounds = array<i64: 1, 128>}, {transform_indices = @transform_3, window_bounds = array<i64: 128, 128>}]} {
    %c0_i32 = arith.constant 0 : i32
    %0 = arith.cmpi eq, %arg1, %c0_i32 : i32
    %1 = arith.extui %0 : i1 to i32
    %c0_i32_0 = arith.constant 0 : i32
    %2 = arith.cmpi ne, %1, %c0_i32_0 : i32
    scf.if %2 {
      %cst_10 = arith.constant 0.000000e+00 : f32
      %12 = vector.broadcast %cst_10 : f32 to vector<128x128xf32>
      %c0_11 = arith.constant 0 : index
      %c0_12 = arith.constant 0 : index
      %13 = vector.load %arg6[%c0_11, %c0_12] : memref<128x128xf32, #tpu.memory_space<vmem>>, vector<128x128xf32>
      tpu.vector_store %arg6[%c0_11, %c0_12], %12 {strides = array<i32>} : memref<128x128xf32, #tpu.memory_space<vmem>>, vector<128x128xf32>,
    } else {
    }
    %c0 = arith.constant 0 : index
    %c0_1 = arith.constant 0 : index
    %3 = vector.load %arg6[%c0, %c0_1] : memref<128x128xf32, #tpu.memory_space<vmem>>, vector<128x128xf32>
    %c0_2 = arith.constant 0 : index
    %c0_3 = arith.constant 0 : index
    %4 = vector.load %arg2[%c0_2, %c0_3] : memref<128x128xbf16, #tpu.memory_space<vmem>>, vector<128x128xbf16>
    %c0_4 = arith.constant 0 : index
    %c0_5 = arith.constant 0 : index
    %5 = vector.load %arg3[%c0_4, %c0_5] : memref<128x128xbf16, #tpu.memory_space<vmem>>, vector<128x128xbf16>
    %cst = arith.constant dense<0.000000e+00> : vector<128x128xf32>
    %6 = tpu.matmul %4, %5, %cst {dimension_numbers = #tpu.dot_dimension_numbers<[1], [0], [0], [1], [0, 0, 1, 1], [], []>} : vector<128x128xbf16>, vector<128x128xbf16>, vector<128x128xf32> -> vector<128x128xf32>
    %7 = arith.addf %3, %6 : vector<128x128xf32>
    %c0_6 = arith.constant 0 : index
    %c0_7 = arith.constant 0 : index
    %8 = vector.load %arg6[%c0_6, %c0_7] : memref<128x128xf32, #tpu.memory_space<vmem>>, vector<128x128xf32>
    tpu.vector_store %arg6[%c0_6, %c0_7], %7 {strides = array<i32>} : memref<128x128xf32, #tpu.memory_space<vmem>>, vector<128x128xf32>,
    %c0_i32_8 = arith.constant 0 : i32
    %9 = arith.cmpi eq, %arg1, %c0_i32_8 : i32
    %10 = arith.extui %9 : i1 to i32
    %c0_i32_9 = arith.constant 0 : i32
    %11 = arith.cmpi ne, %10, %c0_i32_9 : i32
    scf.if %11 {
      %c0_10 = arith.constant 0 : index
      %c0_11 = arith.constant 0 : index
      %12 = vector.load %arg6[%c0_10, %c0_11] : memref<128x128xf32, #tpu.memory_space<vmem>>, vector<128x128xf32>
      %c0_12 = arith.constant 0 : index
      %c0_13 = arith.constant 0 : index
      %13 = vector.load %arg4[%c0_12, %c0_13] : memref<1x128xf32, #tpu.memory_space<vmem>>, vector<1x128xf32>
      %14 = vector.broadcast %13 : vector<1x128xf32> to vector<128x128xf32>
      %15 = arith.addf %12, %14 : vector<128x128xf32>
      %c0_14 = arith.constant 0 : index
      %c0_15 = arith.constant 0 : index
      %16 = vector.load %arg5[%c0_14, %c0_15] : memref<128x128xf32, #tpu.memory_space<vmem>>, vector<128x128xf32>
      tpu.vector_store %arg5[%c0_14, %c0_15], %15 {strides = array<i32>} : memref<128x128xf32, #tpu.memory_space<vmem>>, vector<128x128xf32>,
    } else {
    }
    return
  }
  func.func @transform_0(%arg0: i32, %arg1: i32) -> (i32, i32) {
    %c0_i32 = arith.constant 0 : i32
    return %arg0, %arg1 : i32, i32
  }
  func.func @transform_1(%arg0: i32, %arg1: i32) -> (i32, i32) {
    %c0_i32 = arith.constant 0 : i32
    %c0_i32_0 = arith.constant 0 : i32
    return %arg1, %c0_i32 : i32, i32
  }
  func.func @transform_2(%arg0: i32, %arg1: i32) -> (i32, i32) {
    %c0_i32 = arith.constant 0 : i32
    %c0_i32_0 = arith.constant 0 : i32
    %c0_i32_1 = arith.constant 0 : i32
    return %c0_i32, %c0_i32_0 : i32, i32
  }
  func.func @transform_3(%arg0: i32, %arg1: i32) -> (i32, i32) {
    %c0_i32 = arith.constant 0 : i32
    %c0_i32_0 = arith.constant 0 : i32
    return %arg0, %c0_i32 : i32, i32
  }
}

module attributes {stable_mosaic.version = 11 : i64} {
  func.func @aggregate_kernel(%arg0: i32, %arg1: i32, %arg2: memref<128x128xbf16, #tpu.memory_space<vmem>>, %arg3: memref<128x128xbf16, #tpu.memory_space<vmem>>, %arg4: memref<1x128xf32, #tpu.memory_space<vmem>>, %arg5: memref<128x128xbf16, #tpu.memory_space<vmem>>, %arg6: memref<128x128xbf16, #tpu.memory_space<vmem>>, %arg7: memref<128x128xf32, #tpu.memory_space<vmem>>) attributes {dimension_semantics = [#tpu.dimension_semantics<parallel>, #tpu.dimension_semantics<arbitrary>], iteration_bounds = array<i64: 1, 1>, scalar_prefetch = 0 : i64, scratch_operands = 1 : i64, tpu.core_type = #tpu.core_type<tc>, window_params = [{transform_indices = @transform_0, window_bounds = array<i64: 128, 128>}, {transform_indices = @transform_1, window_bounds = array<i64: 128, 128>}, {pipeline_mode = #tpu.pipeline_mode<synchronous>, transform_indices = @transform_2, window_bounds = array<i64: 1, 128>}, {pipeline_mode = #tpu.pipeline_mode<synchronous>, transform_indices = @transform_3, window_bounds = array<i64: 128, 128>}, {transform_indices = @transform_4, window_bounds = array<i64: 128, 128>}]} {
    %c0_i32 = arith.constant 0 : i32
    %0 = arith.cmpi eq, %arg1, %c0_i32 : i32
    %1 = arith.extui %0 : i1 to i32
    %c0_i32_0 = arith.constant 0 : i32
    %2 = arith.cmpi ne, %1, %c0_i32_0 : i32
    scf.if %2 {
      %cst_10 = arith.constant 0.000000e+00 : f32
      %12 = vector.broadcast %cst_10 : f32 to vector<128x128xf32>
      %c0_11 = arith.constant 0 : index
      %c0_12 = arith.constant 0 : index
      %13 = vector.load %arg7[%c0_11, %c0_12] : memref<128x128xf32, #tpu.memory_space<vmem>>, vector<128x128xf32>
      tpu.vector_store %arg7[%c0_11, %c0_12], %12 {strides = array<i32>} : memref<128x128xf32, #tpu.memory_space<vmem>>, vector<128x128xf32>,
    } else {
    }
    %c0 = arith.constant 0 : index
    %c0_1 = arith.constant 0 : index
    %3 = vector.load %arg7[%c0, %c0_1] : memref<128x128xf32, #tpu.memory_space<vmem>>, vector<128x128xf32>
    %c0_2 = arith.constant 0 : index
    %c0_3 = arith.constant 0 : index
    %4 = vector.load %arg2[%c0_2, %c0_3] : memref<128x128xbf16, #tpu.memory_space<vmem>>, vector<128x128xbf16>
    %c0_4 = arith.constant 0 : index
    %c0_5 = arith.constant 0 : index
    %5 = vector.load %arg3[%c0_4, %c0_5] : memref<128x128xbf16, #tpu.memory_space<vmem>>, vector<128x128xbf16>
    %cst = arith.constant dense<0.000000e+00> : vector<128x128xf32>
    %6 = tpu.matmul %4, %5, %cst {dimension_numbers = #tpu.dot_dimension_numbers<[1], [0], [0], [1], [0, 0, 1, 1], [], []>} : vector<128x128xbf16>, vector<128x128xbf16>, vector<128x128xf32> -> vector<128x128xf32>
    %7 = arith.addf %3, %6 : vector<128x128xf32>
    %c0_6 = arith.constant 0 : index
    %c0_7 = arith.constant 0 : index
    %8 = vector.load %arg7[%c0_6, %c0_7] : memref<128x128xf32, #tpu.memory_space<vmem>>, vector<128x128xf32>
    tpu.vector_store %arg7[%c0_6, %c0_7], %7 {strides = array<i32>} : memref<128x128xf32, #tpu.memory_space<vmem>>, vector<128x128xf32>,
    %c0_i32_8 = arith.constant 0 : i32
    %9 = arith.cmpi eq, %arg1, %c0_i32_8 : i32
    %10 = arith.extui %9 : i1 to i32
    %c0_i32_9 = arith.constant 0 : i32
    %11 = arith.cmpi ne, %10, %c0_i32_9 : i32
    scf.if %11 {
      %c0_10 = arith.constant 0 : index
      %c0_11 = arith.constant 0 : index
      %12 = vector.load %arg7[%c0_10, %c0_11] : memref<128x128xf32, #tpu.memory_space<vmem>>, vector<128x128xf32>
      %c0_12 = arith.constant 0 : index
      %c0_13 = arith.constant 0 : index
      %13 = vector.load %arg4[%c0_12, %c0_13] : memref<1x128xf32, #tpu.memory_space<vmem>>, vector<1x128xf32>
      %14 = vector.broadcast %13 : vector<1x128xf32> to vector<128x128xf32>
      %15 = arith.addf %12, %14 : vector<128x128xf32>
      %cst_14 = arith.constant 0.000000e+00 : f32
      %16 = vector.broadcast %cst_14 : f32 to vector<128x128xf32>
      %17 = arith.maximumf %15, %16 : vector<128x128xf32>
      %18 = arith.truncf %17 : vector<128x128xf32> to vector<128x128xbf16>
      %c0_15 = arith.constant 0 : index
      %c0_16 = arith.constant 0 : index
      %19 = vector.load %arg5[%c0_15, %c0_16] : memref<128x128xbf16, #tpu.memory_space<vmem>>, vector<128x128xbf16>
      %cst_17 = arith.constant dense<0.000000e+00> : vector<128x128xf32>
      %20 = tpu.matmul %18, %19, %cst_17 {dimension_numbers = #tpu.dot_dimension_numbers<[1], [0], [0], [1], [0, 0, 1, 1], [], []>} : vector<128x128xbf16>, vector<128x128xbf16>, vector<128x128xf32> -> vector<128x128xf32>
      %21 = arith.truncf %20 : vector<128x128xf32> to vector<128x128xbf16>
      %c0_18 = arith.constant 0 : index
      %c0_19 = arith.constant 0 : index
      %22 = vector.load %arg6[%c0_18, %c0_19] : memref<128x128xbf16, #tpu.memory_space<vmem>>, vector<128x128xbf16>
      tpu.vector_store %arg6[%c0_18, %c0_19], %21 {strides = array<i32>} : memref<128x128xbf16, #tpu.memory_space<vmem>>, vector<128x128xbf16>,
    } else {
    }
    return
  }
  func.func @transform_0(%arg0: i32, %arg1: i32) -> (i32, i32) {
    %c0_i32 = arith.constant 0 : i32
    return %arg0, %arg1 : i32, i32
  }
  func.func @transform_1(%arg0: i32, %arg1: i32) -> (i32, i32) {
    %c0_i32 = arith.constant 0 : i32
    %c0_i32_0 = arith.constant 0 : i32
    return %arg1, %c0_i32 : i32, i32
  }
  func.func @transform_2(%arg0: i32, %arg1: i32) -> (i32, i32) {
    %c0_i32 = arith.constant 0 : i32
    %c0_i32_0 = arith.constant 0 : i32
    %c0_i32_1 = arith.constant 0 : i32
    return %c0_i32, %c0_i32_0 : i32, i32
  }
  func.func @transform_3(%arg0: i32, %arg1: i32) -> (i32, i32) {
    %c0_i32 = arith.constant 0 : i32
    %c0_i32_0 = arith.constant 0 : i32
    %c0_i32_1 = arith.constant 0 : i32
    return %c0_i32, %c0_i32_0 : i32, i32
  }
  func.func @transform_4(%arg0: i32, %arg1: i32) -> (i32, i32) {
    %c0_i32 = arith.constant 0 : i32
    %c0_i32_0 = arith.constant 0 : i32
    return %arg0, %c0_i32 : i32, i32
  }
}

</mosaic_0001>

<llo_original>
// kernel: gcn_forward.3
$region0: #{gcn_forward.3}
  #allocation0 [shape = 'u32[]', space=smem, size = 0x4, offset = 0x4, fixed_abs, tag = 'smem constant byte address 0x4 - core index']
  #allocation1 [shape = 'u32[144,128]{1,0:T(1,128)}', space=vmem, size = 0x12000, scoped, tag = 'internal scratch']
  %s0 = inlined_call_operand.vmem [shape: bf16[128,64], index: 0, kind: input, shape index: {}]
  %s1 = inlined_call_operand.vmem [shape: bf16[64,128], index: 1, kind: input, shape index: {}]
  %s2 = inlined_call_operand.vmem [shape: bf16[128,128], index: 2, kind: output, shape index: {}]
  %s3 = sld [smem:[#allocation0]]
  $region18: #{gcn_forward.3} parent=0
    _
  %s5 = ssub.s32 1, %s3
  %s6 = scalar_select 0, %s5, %s3
  // Predicated region
  $region2: #{gcn_forward.3} parent=0 // pred_check
    _
  $region3: #{gcn_forward.3} parent=0 // pred_check_branch
    %8 = sbr.rel (0) target = $region5
  $region4: #{gcn_forward.3} parent=0 // pred_region
    _
  $region5: #{gcn_forward.3} parent=0 // pred_fallthru
    _
  // Predicated region
  $region6: #{gcn_forward.3} parent=0 // pred_check
    _
  $region7: #{gcn_forward.3} parent=0 // pred_check_branch
    %10 = sbr.rel (0) target = $region9
  $region8: #{gcn_forward.3} parent=0 // pred_region
    _
  $region9: #{gcn_forward.3} parent=0 // pred_fallthru
    _
  %v12 = vld [vmem:[%s0] sm:$0xf]
  %v13 = vld [vmem:[%s0 + $0x4] sm:$0xf]
  %v14 = vld [vmem:[%s0 + $0x8] sm:$0xf]
  %v15 = vld [vmem:[%s0 + $0xc] sm:$0xf]
  %v16 = vld [vmem:[%s0 + $0x10] sm:$0xf]
  %v17 = vld [vmem:[%s0 + $0x14] sm:$0xf]
  %v18 = vld [vmem:[%s0 + $0x18] sm:$0xf]
  %v19 = vld [vmem:[%s0 + $0x1c] sm:$0xf]
  %v20 = vld [vmem:[%s0 + $0x20] sm:$0xf]
  %v21 = vld [vmem:[%s0 + $0x24] sm:$0xf]
  %v22 = vld [vmem:[%s0 + $0x28] sm:$0xf]
  %v23 = vld [vmem:[%s0 + $0x2c] sm:$0xf]
  %v24 = vld [vmem:[%s0 + $0x30] sm:$0xf]
  %v25 = vld [vmem:[%s0 + $0x34] sm:$0xf]
  %v26 = vld [vmem:[%s0 + $0x38] sm:$0xf]
  %v27 = vld [vmem:[%s0 + $0x3c] sm:$0xf]
  %v28 = vld [vmem:[%s1] sm:$0xf]
  %v29 = vld [vmem:[%s1 + $0x4] sm:$0xf]
  %v30 = vld [vmem:[%s1 + $0x8] sm:$0xf]
  %v31 = vld [vmem:[%s1 + $0xc] sm:$0xf]
  %v32 = vld [vmem:[%s1 + $0x10] sm:$0xf]
  %v33 = vld [vmem:[%s1 + $0x14] sm:$0xf]
  %v34 = vld [vmem:[%s1 + $0x18] sm:$0xf]
  %v35 = vld [vmem:[%s1 + $0x1c] sm:$0xf]
  %v52 = vunpack.c.l.b16 %v12
  %v53 = vunpack.c.l.b16 %v13
  %v54 = vunpack.c.l.b16 %v14
  %v55 = vunpack.c.l.b16 %v15
  %v56 = vunpack.c.l.b16 %v16
  %v57 = vunpack.c.l.b16 %v17
  %v58 = vunpack.c.l.b16 %v18
  %v59 = vunpack.c.l.b16 %v19
  %v60 = vunpack.c.l.b16 %v20
  %v61 = vunpack.c.l.b16 %v21
  %v62 = vunpack.c.l.b16 %v22
  %v63 = vunpack.c.l.b16 %v23
  %v64 = vunpack.c.l.b16 %v24
  %v65 = vunpack.c.l.b16 %v25
  %v66 = vunpack.c.l.b16 %v26
  %v67 = vunpack.c.l.b16 %v27
  %v68 = vpack.c.b16 %v53, %v52
  %v69 = vpack.c.b16 %v55, %v54
  %v70 = vpack.c.b16 %v57, %v56
  %v71 = vpack.c.b16 %v59, %v58
  %v72 = vpack.c.b16 %v61, %v60
  %v73 = vpack.c.b16 %v63, %v62
  %v74 = vpack.c.b16 %v65, %v64
  %v75 = vpack.c.b16 %v67, %v66
  %v84 = vunpack.c.l.b16 %v28
  %v85 = vunpack.c.l.b16 %v29
  %v86 = vunpack.c.l.b16 %v30
  %v87 = vunpack.c.l.b16 %v31
  %v88 = vunpack.c.l.b16 %v32
  %v89 = vunpack.c.l.b16 %v33
  %v90 = vunpack.c.l.b16 %v34
  %v91 = vunpack.c.l.b16 %v35
  %v92 = vpack.c.b16 %v85, %v84
  %v93 = vpack.c.b16 %v87, %v86
  %v94 = vpack.c.b16 %v89, %v88
  %v95 = vpack.c.b16 %v91, %v90
  %vm100 = vcmask 523264
  %v102 = vsel %vm100, %v68, 0
  %v105 = vsel %vm100, %v69, 0
  %v108 = vsel %vm100, %v70, 0
  %v111 = vsel %vm100, %v71, 0
  %v114 = vsel %vm100, %v72, 0
  %v117 = vsel %vm100, %v73, 0
  %v120 = vsel %vm100, %v74, 0
  %v123 = vsel %vm100, %v75, 0
  %125 = vmatprep.subr.bf16.mxu0 0
  %126 = vmatpush1.bf16.msra.mxu0 0
  %127 = vmatprep.subr.bf16.mxu0 0
  %128 = vmatpush1.bf16.msra.mxu0 0
  %129 = vmatprep.subr.bf16.mxu0 0
  %130 = vmatpush1.bf16.msra.mxu0 0
  %131 = vmatprep.subr.bf16.mxu0 0
  %132 = vmatpush1.bf16.msra.mxu0 0
  %133 = vmatprep.subr.bf16.mxu0 0
  %134 = vmatpush1.bf16.msra.mxu0 %v95
  %135 = vmatprep.subr.bf16.mxu0 0
  %136 = vmatpush1.bf16.msra.mxu0 %v94
  %137 = vmatprep.subr.bf16.mxu0 0
  %138 = vmatpush1.bf16.msra.mxu0 %v93
  %139 = vmatprep.subr.bf16.mxu0 0
  %140 = vmatpush1.bf16.msra.mxu0 %v92
  %141 = vmatprep.subr.bf16.mxu0 0
  %142 = vmatpush2.bf16.msra.mxu0 0
  %143 = vmatprep.subr.bf16.mxu0 0
  %144 = vmatpush2.bf16.msra.mxu0 0
  %145 = vmatprep.subr.bf16.mxu0 0
  %146 = vmatpush2.bf16.msra.mxu0 0
  %147 = vmatprep.subr.bf16.mxu0 0
  %148 = vmatpush2.bf16.msra.mxu0 0
  %149 = vmatprep.subr.bf16.mxu0 0
  %150 = vmatpush2.bf16.msra.mxu0 0
  %151 = vmatprep.subr.bf16.mxu0 0
  %152 = vmatpush2.bf16.msra.mxu0 0
  %153 = vmatprep.subr.bf16.mxu0 0
  %154 = vmatpush2.bf16.msra.mxu0 0
  %155 = vmatprep.subr.bf16.mxu0 0
  %156 = vmatpush2.bf16.msra.mxu0 0
  %157 = vmatprep.mubr.bf16.mxu0 0
  %158 = vmatmul.mubr.bf16.gmra.mxu0 %v102
  %v159 = vpop.f32.mrf.mxu0
  %v160 = vadd.f32 0.0, %v159
  %v161 = vpop.f32.mrf.mxu0
  %v162 = vpop.f32.mrf.mxu0
  %v163 = vadd.f32 0.0, %v162
  %v164 = vpop.f32.mrf.mxu0
  %165 = vmatprep.mubr.bf16.mxu0 0
  %166 = vmatmul.mubr.bf16.gmra.mxu0 %v105
  %v167 = vpop.f32.mrf.mxu0
  %v168 = vadd.f32 0.0, %v167
  %v169 = vpop.f32.mrf.mxu0
  %v170 = vpop.f32.mrf.mxu0
  %v171 = vadd.f32 0.0, %v170
  %v172 = vpop.f32.mrf.mxu0
  %173 = vmatprep.mubr.bf16.mxu0 0
  %174 = vmatmul.mubr.bf16.gmra.mxu0 %v108
  %v175 = vpop.f32.mrf.mxu0
  %v176 = vadd.f32 0.0, %v175
  %v177 = vpop.f32.mrf.mxu0
  %v178 = vpop.f32.mrf.mxu0
  %v179 = vadd.f32 0.0, %v178
  %v180 = vpop.f32.mrf.mxu0
  %181 = vmatprep.mubr.bf16.mxu0 0
  %182 = vmatmul.mubr.bf16.gmra.mxu0 %v111
  %v183 = vpop.f32.mrf.mxu0
  %v184 = vadd.f32 0.0, %v183
  %v185 = vpop.f32.mrf.mxu0
  %v186 = vpop.f32.mrf.mxu0
  %v187 = vadd.f32 0.0, %v186
  %v188 = vpop.f32.mrf.mxu0
  %189 = vmatprep.mubr.bf16.mxu0 0
  %190 = vmatmul.mubr.bf16.gmra.mxu0 %v114
  %v191 = vpop.f32.mrf.mxu0
  %v192 = vadd.f32 0.0, %v191
  %v193 = vpop.f32.mrf.mxu0
  %v194 = vpop.f32.mrf.mxu0
  %v195 = vadd.f32 0.0, %v194
  %v196 = vpop.f32.mrf.mxu0
  %197 = vmatprep.mubr.bf16.mxu0 0
  %198 = vmatmul.mubr.bf16.gmra.mxu0 %v117
  %v199 = vpop.f32.mrf.mxu0
  %v200 = vadd.f32 0.0, %v199
  %v201 = vpop.f32.mrf.mxu0
  %v202 = vpop.f32.mrf.mxu0
  %v203 = vadd.f32 0.0, %v202
  %v204 = vpop.f32.mrf.mxu0
  %205 = vmatprep.mubr.bf16.mxu0 0
  %206 = vmatmul.mubr.bf16.gmra.mxu0 %v120
  %v207 = vpop.f32.mrf.mxu0
  %v208 = vadd.f32 0.0, %v207
  %v209 = vpop.f32.mrf.mxu0
  %v210 = vpop.f32.mrf.mxu0
  %v211 = vadd.f32 0.0, %v210
  %v212 = vpop.f32.mrf.mxu0
  %213 = vmatprep.mubr.bf16.mxu0 0
  %214 = vmatmul.mubr.bf16.gmra.mxu0 %v123
  %v215 = vpop.f32.mrf.mxu0
  %v216 = vadd.f32 0.0, %v215
  %v217 = vpop.f32.mrf.mxu0
  %v218 = vpop.f32.mrf.mxu0
  %v219 = vadd.f32 0.0, %v218
  %v220 = vpop.f32.mrf.mxu0
  %221 = vdwg.mxu0
  %v222 = vpack.c.bf16 %v163, %v160
  %v223 = vpack.c.bf16 %v171, %v168
  %v224 = vpack.c.bf16 %v179, %v176
  %v225 = vpack.c.bf16 %v187, %v184
  %v226 = vpack.c.bf16 %v195, %v192
  %v227 = vpack.c.bf16 %v203, %v200
  %v228 = vpack.c.bf16 %v211, %v208
  %v229 = vpack.c.bf16 %v219, %v216
  %v238 = vunpack.c.l.b16 %v222
  %v239 = vunpack.c.h.b16 %v222
  %v240 = vunpack.c.l.b16 %v223
  %v241 = vunpack.c.h.b16 %v223
  %v242 = vunpack.c.l.b16 %v224
  %v243 = vunpack.c.h.b16 %v224
  %v244 = vunpack.c.l.b16 %v225
  %v245 = vunpack.c.h.b16 %v225
  %v246 = vunpack.c.l.b16 %v226
  %v247 = vunpack.c.h.b16 %v226
  %v248 = vunpack.c.l.b16 %v227
  %v249 = vunpack.c.h.b16 %v227
  %v250 = vunpack.c.l.b16 %v228
  %v251 = vunpack.c.h.b16 %v228
  %v252 = vunpack.c.l.b16 %v229
  %v253 = vunpack.c.h.b16 %v229
  %v254 = vpack.c.b16 %v238, %v238
  %v255 = vpack.c.b16 %v239, %v239
  %v256 = vpack.c.b16 %v240, %v240
  %v257 = vpack.c.b16 %v241, %v241
  %v258 = vpack.c.b16 %v242, %v242
  %v259 = vpack.c.b16 %v243, %v243
  %v260 = vpack.c.b16 %v244, %v244
  %v261 = vpack.c.b16 %v245, %v245
  %v262 = vpack.c.b16 %v246, %v246
  %v263 = vpack.c.b16 %v247, %v247
  %v264 = vpack.c.b16 %v248, %v248
  %v265 = vpack.c.b16 %v249, %v249
  %v266 = vpack.c.b16 %v250, %v250
  %v267 = vpack.c.b16 %v251, %v251
  %v268 = vpack.c.b16 %v252, %v252
  %v269 = vpack.c.b16 %v253, %v253
  %286 = vst [vmem:[%s2] sm:$0xf] %v254
  %287 = vst [vmem:[%s2 + $0x4] sm:$0xf] %v255
  %288 = vst [vmem:[%s2 + $0x8] sm:$0xf] %v256
  %289 = vst [vmem:[%s2 + $0xc] sm:$0xf] %v257
  %290 = vst [vmem:[%s2 + $0x10] sm:$0xf] %v258
  %291 = vst [vmem:[%s2 + $0x14] sm:$0xf] %v259
  %292 = vst [vmem:[%s2 + $0x18] sm:$0xf] %v260
  %293 = vst [vmem:[%s2 + $0x1c] sm:$0xf] %v261
  %294 = vst [vmem:[%s2 + $0x20] sm:$0xf] %v262
  %295 = vst [vmem:[%s2 + $0x24] sm:$0xf] %v263
  %296 = vst [vmem:[%s2 + $0x28] sm:$0xf] %v264
  %297 = vst [vmem:[%s2 + $0x2c] sm:$0xf] %v265
  %298 = vst [vmem:[%s2 + $0x30] sm:$0xf] %v266
  %299 = vst [vmem:[%s2 + $0x34] sm:$0xf] %v267
  %300 = vst [vmem:[%s2 + $0x38] sm:$0xf] %v268
  %301 = vst [vmem:[%s2 + $0x3c] sm:$0xf] %v269
  // Predicated region
  $region10: #{gcn_forward.3} parent=0 // pred_check
    _
  $region11: #{gcn_forward.3} parent=0 // pred_check_branch
    %303 = sbr.rel (0) target = $region13
  $region12: #{gcn_forward.3} parent=0 // pred_region
    _
  $region13: #{gcn_forward.3} parent=0 // pred_fallthru
    _
  // Predicated region
  $region14: #{gcn_forward.3} parent=0 // pred_check
    _
  $region15: #{gcn_forward.3} parent=0 // pred_check_branch
    %305 = sbr.rel (0) target = $region17
  $region16: #{gcn_forward.3} parent=0 // pred_region
    _
  $region17: #{gcn_forward.3} parent=0 // pred_fallthru
    _

// kernel: gcn_forward.5
$region0: #{gcn_forward.5}
  #allocation0 [shape = 'u32[]', space=smem, size = 0x4, offset = 0x4, fixed_abs, tag = 'smem constant byte address 0x4 - core index']
  #allocation1 [shape = 'u32[144,128]{1,0:T(1,128)}', space=vmem, size = 0x12000, scoped, tag = 'internal scratch']
  #allocation2 [shape = 'f32[128,128]{1,0:T(8,128)}', space=vmem, size = 0x10000, scoped, tag = 'scratch operand']
  %s0 = inlined_call_operand.vmem [shape: bf16[128,128], index: 0, kind: input, shape index: {}]
  %s1 = inlined_call_operand.vmem [shape: bf16[128,128], index: 1, kind: input, shape index: {}]
  %s2 = inlined_call_operand.vmem [shape: f32[1,128], index: 2, kind: input, shape index: {}]
  %s3 = inlined_call_operand.vmem [shape: f32[128,128], index: 3, kind: output, shape index: {}]
  %s4 = sld [smem:[#allocation0]]
  $region30: #{gcn_forward.5} parent=0
    _
  %s6 = ssub.s32 1, %s4
  %s7 = scalar_select 0, %s6, %s4
  // Predicated region
  $region2: #{gcn_forward.5} parent=0 // pred_check
    _
  $region3: #{gcn_forward.5} parent=0 // pred_check_branch
    %9 = sbr.rel (0) target = $region5
  $region4: #{gcn_forward.5} parent=0 // pred_region
    _
  $region5: #{gcn_forward.5} parent=0 // pred_fallthru
    _
  // Predicated region
  $region6: #{gcn_forward.5} parent=0 // pred_check
    _
  $region7: #{gcn_forward.5} parent=0 // pred_check_branch
    %11 = sbr.rel (0) target = $region9
  $region8: #{gcn_forward.5} parent=0 // pred_region
    _
  $region9: #{gcn_forward.5} parent=0 // pred_fallthru
    _
  // Predicated region
  $region10: #{gcn_forward.5} parent=0 // pred_check
    _
  $region11: #{gcn_forward.5} parent=0 // pred_check_branch
    %13 = sbr.rel (0) target = $region13
  $region12: #{gcn_forward.5} parent=0 // pred_region
    _
  $region13: #{gcn_forward.5} parent=0 // pred_fallthru
    _
  %p15 = scmp.eq.s32.totalorder 0, 0
  // Predicated region
  $region14: #{gcn_forward.5} parent=0 // pred_check
    %p16 = pneg %p15
  $region15: #{gcn_forward.5} parent=0 // pred_check_branch
    %18 = sbr.rel (%p16) target = $region17
  $region16: #{gcn_forward.5} parent=0 // pred_region
    %19 = vst [vmem:[#allocation2] sm:$0xff] 0.0
    %20 = vst [vmem:[#allocation2 + $0x8] sm:$0xff] 0.0
    %21 = vst [vmem:[#allocation2 + $0x10] sm:$0xff] 0.0
    %22 = vst [vmem:[#allocation2 + $0x18] sm:$0xff] 0.0
    %23 = vst [vmem:[#allocation2 + $0x20] sm:$0xff] 0.0
    %24 = vst [vmem:[#allocation2 + $0x28] sm:$0xff] 0.0
    %25 = vst [vmem:[#allocation2 + $0x30] sm:$0xff] 0.0
    %26 = vst [vmem:[#allocation2 + $0x38] sm:$0xff] 0.0
    %27 = vst [vmem:[#allocation2 + $0x40] sm:$0xff] 0.0
    %28 = vst [vmem:[#allocation2 + $0x48] sm:$0xff] 0.0
    %29 = vst [vmem:[#allocation2 + $0x50] sm:$0xff] 0.0
    %30 = vst [vmem:[#allocation2 + $0x58] sm:$0xff] 0.0
    %31 = vst [vmem:[#allocation2 + $0x60] sm:$0xff] 0.0
    %32 = vst [vmem:[#allocation2 + $0x68] sm:$0xff] 0.0
    %33 = vst [vmem:[#allocation2 + $0x70] sm:$0xff] 0.0
    %34 = vst [vmem:[#allocation2 + $0x78] sm:$0xff] 0.0
  $region17: #{gcn_forward.5} parent=0 // pred_fallthru
    _
  %v35 = vld [vmem:[#allocation2] sm:$0xff]
  %v36 = vld [vmem:[#allocation2 + $0x8] sm:$0xff]
  %v37 = vld [vmem:[#allocation2 + $0x10] sm:$0xff]
  %v38 = vld [vmem:[#allocation2 + $0x18] sm:$0xff]
  %v39 = vld [vmem:[#allocation2 + $0x20] sm:$0xff]
  %v40 = vld [vmem:[#allocation2 + $0x28] sm:$0xff]
  %v41 = vld [vmem:[#allocation2 + $0x30] sm:$0xff]
  %v42 = vld [vmem:[#allocation2 + $0x38] sm:$0xff]
  %v43 = vld [vmem:[#allocation2 + $0x40] sm:$0xff]
  %v44 = vld [vmem:[#allocation2 + $0x48] sm:$0xff]
  %v45 = vld [vmem:[#allocation2 + $0x50] sm:$0xff]
  %v46 = vld [vmem:[#allocation2 + $0x58] sm:$0xff]
  %v47 = vld [vmem:[#allocation2 + $0x60] sm:$0xff]
  %v48 = vld [vmem:[#allocation2 + $0x68] sm:$0xff]
  %v49 = vld [vmem:[#allocation2 + $0x70] sm:$0xff]
  %v50 = vld [vmem:[#allocation2 + $0x78] sm:$0xff]
  %v51 = vld [vmem:[%s0] sm:$0xf]
  %v52 = vld [vmem:[%s0 + $0x4] sm:$0xf]
  %v53 = vld [vmem:[%s0 + $0x8] sm:$0xf]
  %v54 = vld [vmem:[%s0 + $0xc] sm:$0xf]
  %v55 = vld [vmem:[%s0 + $0x10] sm:$0xf]
  %v56 = vld [vmem:[%s0 + $0x14] sm:$0xf]
  %v57 = vld [vmem:[%s0 + $0x18] sm:$0xf]
  %v58 = vld [vmem:[%s0 + $0x1c] sm:$0xf]
  %v59 = vld [vmem:[%s0 + $0x20] sm:$0xf]
  %v60 = vld [vmem:[%s0 + $0x24] sm:$0xf]
  %v61 = vld [vmem:[%s0 + $0x28] sm:$0xf]
  %v62 = vld [vmem:[%s0 + $0x2c] sm:$0xf]
  %v63 = vld [vmem:[%s0 + $0x30] sm:$0xf]
  %v64 = vld [vmem:[%s0 + $0x34] sm:$0xf]
  %v65 = vld [vmem:[%s0 + $0x38] sm:$0xf]
  %v66 = vld [vmem:[%s0 + $0x3c] sm:$0xf]
  %v67 = vld [vmem:[%s1] sm:$0xf]
  %v68 = vld [vmem:[%s1 + $0x4] sm:$0xf]
  %v69 = vld [vmem:[%s1 + $0x8] sm:$0xf]
  %v70 = vld [vmem:[%s1 + $0xc] sm:$0xf]
  %v71 = vld [vmem:[%s1 + $0x10] sm:$0xf]
  %v72 = vld [vmem:[%s1 + $0x14] sm:$0xf]
  %v73 = vld [vmem:[%s1 + $0x18] sm:$0xf]
  %v74 = vld [vmem:[%s1 + $0x1c] sm:$0xf]
  %v75 = vld [vmem:[%s1 + $0x20] sm:$0xf]
  %v76 = vld [vmem:[%s1 + $0x24] sm:$0xf]
  %v77 = vld [vmem:[%s1 + $0x28] sm:$0xf]
  %v78 = vld [vmem:[%s1 + $0x2c] sm:$0xf]
  %v79 = vld [vmem:[%s1 + $0x30] sm:$0xf]
  %v80 = vld [vmem:[%s1 + $0x34] sm:$0xf]
  %v81 = vld [vmem:[%s1 + $0x38] sm:$0xf]
  %v82 = vld [vmem:[%s1 + $0x3c] sm:$0xf]
  %v99 = vunpack.c.l.b16 %v51
  %v100 = vunpack.c.l.b16 %v52
  %v101 = vunpack.c.l.b16 %v53
  %v102 = vunpack.c.l.b16 %v54
  %v103 = vunpack.c.l.b16 %v55
  %v104 = vunpack.c.l.b16 %v56
  %v105 = vunpack.c.l.b16 %v57
  %v106 = vunpack.c.l.b16 %v58
  %v107 = vunpack.c.l.b16 %v59
  %v108 = vunpack.c.l.b16 %v60
  %v109 = vunpack.c.l.b16 %v61
  %v110 = vunpack.c.l.b16 %v62
  %v111 = vunpack.c.l.b16 %v63
  %v112 = vunpack.c.l.b16 %v64
  %v113 = vunpack.c.l.b16 %v65
  %v114 = vunpack.c.l.b16 %v66
  %v115 = vpack.c.b16 %v100, %v99
  %v116 = vpack.c.b16 %v102, %v101
  %v117 = vpack.c.b16 %v104, %v103
  %v118 = vpack.c.b16 %v106, %v105
  %v119 = vpack.c.b16 %v108, %v107
  %v120 = vpack.c.b16 %v110, %v109
  %v121 = vpack.c.b16 %v112, %v111
  %v122 = vpack.c.b16 %v114, %v113
  %v147 = vunpack.c.l.b16 %v67
  %v148 = vunpack.c.l.b16 %v68
  %v149 = vunpack.c.l.b16 %v69
  %v150 = vunpack.c.l.b16 %v70
  %v151 = vunpack.c.l.b16 %v71
  %v152 = vunpack.c.l.b16 %v72
  %v153 = vunpack.c.l.b16 %v73
  %v154 = vunpack.c.l.b16 %v74
  %v155 = vunpack.c.l.b16 %v75
  %v156 = vunpack.c.l.b16 %v76
  %v157 = vunpack.c.l.b16 %v77
  %v158 = vunpack.c.l.b16 %v78
  %v159 = vunpack.c.l.b16 %v79
  %v160 = vunpack.c.l.b16 %v80
  %v161 = vunpack.c.l.b16 %v81
  %v162 = vunpack.c.l.b16 %v82
  %v163 = vpack.c.b16 %v148, %v147
  %v164 = vpack.c.b16 %v150, %v149
  %v165 = vpack.c.b16 %v152, %v151
  %v166 = vpack.c.b16 %v154, %v153
  %v167 = vpack.c.b16 %v156, %v155
  %v168 = vpack.c.b16 %v158, %v157
  %v169 = vpack.c.b16 %v160, %v159
  %v170 = vpack.c.b16 %v162, %v161
  %179 = vmatprep.subr.bf16.mxu0 0
  %180 = vmatpush1.bf16.msra.mxu0 %v170
  %181 = vmatprep.subr.bf16.mxu0 0
  %182 = vmatpush1.bf16.msra.mxu0 %v169
  %183 = vmatprep.subr.bf16.mxu0 0
  %184 = vmatpush1.bf16.msra.mxu0 %v168
  %185 = vmatprep.subr.bf16.mxu0 0
  %186 = vmatpush1.bf16.msra.mxu0 %v167
  %187 = vmatprep.subr.bf16.mxu0 0
  %188 = vmatpush1.bf16.msra.mxu0 %v166
  %189 = vmatprep.subr.bf16.mxu0 0
  %190 = vmatpush1.bf16.msra.mxu0 %v165
  %191 = vmatprep.subr.bf16.mxu0 0
  %192 = vmatpush1.bf16.msra.mxu0 %v164
  %193 = vmatprep.subr.bf16.mxu0 0
  %194 = vmatpush1.bf16.msra.mxu0 %v163
  %195 = vmatprep.subr.bf16.mxu0 0
  %196 = vmatpush2.bf16.msra.mxu0 0
  %197 = vmatprep.subr.bf16.mxu0 0
  %198 = vmatpush2.bf16.msra.mxu0 0
  %199 = vmatprep.subr.bf16.mxu0 0
  %200 = vmatpush2.bf16.msra.mxu0 0
  %201 = vmatprep.subr.bf16.mxu0 0
  %202 = vmatpush2.bf16.msra.mxu0 0
  %203 = vmatprep.subr.bf16.mxu0 0
  %204 = vmatpush2.bf16.msra.mxu0 0
  %205 = vmatprep.subr.bf16.mxu0 0
  %206 = vmatpush2.bf16.msra.mxu0 0
  %207 = vmatprep.subr.bf16.mxu0 0
  %208 = vmatpush2.bf16.msra.mxu0 0
  %209 = vmatprep.subr.bf16.mxu0 0
  %210 = vmatpush2.bf16.msra.mxu0 0
  %211 = vmatprep.mubr.bf16.mxu0 0
  %212 = vmatmul.mubr.bf16.gmra.mxu0 %v115
  %v213 = vpop.f32.mrf.mxu0
  %v214 = vadd.f32 0.0, %v213
  %v215 = vpop.f32.mrf.mxu0
  %v216 = vpop.f32.mrf.mxu0
  %v217 = vadd.f32 0.0, %v216
  %v218 = vpop.f32.mrf.mxu0
  %219 = vmatprep.mubr.bf16.mxu0 0
  %220 = vmatmul.mubr.bf16.gmra.mxu0 %v116
  %v221 = vpop.f32.mrf.mxu0
  %v222 = vadd.f32 0.0, %v221
  %v223 = vpop.f32.mrf.mxu0
  %v224 = vpop.f32.mrf.mxu0
  %v225 = vadd.f32 0.0, %v224
  %v226 = vpop.f32.mrf.mxu0
  %227 = vmatprep.mubr.bf16.mxu0 0
  %228 = vmatmul.mubr.bf16.gmra.mxu0 %v117
  %v229 = vpop.f32.mrf.mxu0
  %v230 = vadd.f32 0.0, %v229
  %v231 = vpop.f32.mrf.mxu0
  %v232 = vpop.f32.mrf.mxu0
  %v233 = vadd.f32 0.0, %v232
  %v234 = vpop.f32.mrf.mxu0
  %235 = vmatprep.mubr.bf16.mxu0 0
  %236 = vmatmul.mubr.bf16.gmra.mxu0 %v118
  %v237 = vpop.f32.mrf.mxu0
  %v238 = vadd.f32 0.0, %v237
  %v239 = vpop.f32.mrf.mxu0
  %v240 = vpop.f32.mrf.mxu0
  %v241 = vadd.f32 0.0, %v240
  %v242 = vpop.f32.mrf.mxu0
  %243 = vmatprep.mubr.bf16.mxu0 0
  %244 = vmatmul.mubr.bf16.gmra.mxu0 %v119
  %v245 = vpop.f32.mrf.mxu0
  %v246 = vadd.f32 0.0, %v245
  %v247 = vpop.f32.mrf.mxu0
  %v248 = vpop.f32.mrf.mxu0
  %v249 = vadd.f32 0.0, %v248
  %v250 = vpop.f32.mrf.mxu0
  %251 = vmatprep.mubr.bf16.mxu0 0
  %252 = vmatmul.mubr.bf16.gmra.mxu0 %v120
  %v253 = vpop.f32.mrf.mxu0
  %v254 = vadd.f32 0.0, %v253
  %v255 = vpop.f32.mrf.mxu0
  %v256 = vpop.f32.mrf.mxu0
  %v257 = vadd.f32 0.0, %v256
  %v258 = vpop.f32.mrf.mxu0
  %259 = vmatprep.mubr.bf16.mxu0 0
  %260 = vmatmul.mubr.bf16.gmra.mxu0 %v121
  %v261 = vpop.f32.mrf.mxu0
  %v262 = vadd.f32 0.0, %v261
  %v263 = vpop.f32.mrf.mxu0
  %v264 = vpop.f32.mrf.mxu0
  %v265 = vadd.f32 0.0, %v264
  %v266 = vpop.f32.mrf.mxu0
  %267 = vmatprep.mubr.bf16.mxu0 0
  %268 = vmatmul.mubr.bf16.gmra.mxu0 %v122
  %v269 = vpop.f32.mrf.mxu0
  %v270 = vadd.f32 0.0, %v269
  %v271 = vpop.f32.mrf.mxu0
  %v272 = vpop.f32.mrf.mxu0
  %v273 = vadd.f32 0.0, %v272
  %v274 = vpop.f32.mrf.mxu0
  %275 = vdwg.mxu0
  %v276 = vadd.f32 %v35, %v214
  %v277 = vadd.f32 %v36, %v217
  %v278 = vadd.f32 %v37, %v222
  %v279 = vadd.f32 %v38, %v225
  %v280 = vadd.f32 %v39, %v230
  %v281 = vadd.f32 %v40, %v233
  %v282 = vadd.f32 %v41, %v238
  %v283 = vadd.f32 %v42, %v241
  %v284 = vadd.f32 %v43, %v246
  %v285 = vadd.f32 %v44, %v249
  %v286 = vadd.f32 %v45, %v254
  %v287 = vadd.f32 %v46, %v257
  %v288 = vadd.f32 %v47, %v262
  %v289 = vadd.f32 %v48, %v265
  %v290 = vadd.f32 %v49, %v270
  %v291 = vadd.f32 %v50, %v273
  %292 = vst [vmem:[#allocation2] sm:$0xff] %v276
  %293 = vst [vmem:[#allocation2 + $0x8] sm:$0xff] %v277
  %294 = vst [vmem:[#allocation2 + $0x10] sm:$0xff] %v278
  %295 = vst [vmem:[#allocation2 + $0x18] sm:$0xff] %v279
  %296 = vst [vmem:[#allocation2 + $0x20] sm:$0xff] %v280
  %297 = vst [vmem:[#allocation2 + $0x28] sm:$0xff] %v281
  %298 = vst [vmem:[#allocation2 + $0x30] sm:$0xff] %v282
  %299 = vst [vmem:[#allocation2 + $0x38] sm:$0xff] %v283
  %300 = vst [vmem:[#allocation2 + $0x40] sm:$0xff] %v284
  %301 = vst [vmem:[#allocation2 + $0x48] sm:$0xff] %v285
  %302 = vst [vmem:[#allocation2 + $0x50] sm:$0xff] %v286
  %303 = vst [vmem:[#allocation2 + $0x58] sm:$0xff] %v287
  %304 = vst [vmem:[#allocation2 + $0x60] sm:$0xff] %v288
  %305 = vst [vmem:[#allocation2 + $0x68] sm:$0xff] %v289
  %306 = vst [vmem:[#allocation2 + $0x70] sm:$0xff] %v290
  %307 = vst [vmem:[#allocation2 + $0x78] sm:$0xff] %v291
  // Predicated region
  $region18: #{gcn_forward.5} parent=0 // pred_check
    %p308 = pneg %p15
  $region19: #{gcn_forward.5} parent=0 // pred_check_branch
    %310 = sbr.rel (%p308) target = $region21
  $region20: #{gcn_forward.5} parent=0 // pred_region
    %v311 = vld [vmem:[#allocation2] sm:$0xff]
    %v312 = vld [vmem:[#allocation2 + $0x8] sm:$0xff]
    %v313 = vld [vmem:[#allocation2 + $0x10] sm:$0xff]
    %v314 = vld [vmem:[#allocation2 + $0x18] sm:$0xff]
    %v315 = vld [vmem:[#allocation2 + $0x20] sm:$0xff]
    %v316 = vld [vmem:[#allocation2 + $0x28] sm:$0xff]
    %v317 = vld [vmem:[#allocation2 + $0x30] sm:$0xff]
    %v318 = vld [vmem:[#allocation2 + $0x38] sm:$0xff]
    %v319 = vld [vmem:[#allocation2 + $0x40] sm:$0xff]
    %v320 = vld [vmem:[#allocation2 + $0x48] sm:$0xff]
    %v321 = vld [vmem:[#allocation2 + $0x50] sm:$0xff]
    %v322 = vld [vmem:[#allocation2 + $0x58] sm:$0xff]
    %v323 = vld [vmem:[#allocation2 + $0x60] sm:$0xff]
    %v324 = vld [vmem:[#allocation2 + $0x68] sm:$0xff]
    %v325 = vld [vmem:[#allocation2 + $0x70] sm:$0xff]
    %v326 = vld [vmem:[#allocation2 + $0x78] sm:$0xff]
    %v327 = vld [vmem:[%s2] sm:$0x1]
    %v329 = vlaneseq
    %v330 = vshrl.u32 %v329, 7
    %v331 = vsub.s32 0, %v330
    %v332 = vrot.slane %v327, %v331
    %v334 = vadd.f32 %v311, %v332
    %v335 = vadd.f32 %v312, %v332
    %v336 = vadd.f32 %v313, %v332
    %v337 = vadd.f32 %v314, %v332
    %v338 = vadd.f32 %v315, %v332
    %v339 = vadd.f32 %v316, %v332
    %v340 = vadd.f32 %v317, %v332
    %v341 = vadd.f32 %v318, %v332
    %v342 = vadd.f32 %v319, %v332
    %v343 = vadd.f32 %v320, %v332
    %v344 = vadd.f32 %v321, %v332
    %v345 = vadd.f32 %v322, %v332
    %v346 = vadd.f32 %v323, %v332
    %v347 = vadd.f32 %v324, %v332
    %v348 = vadd.f32 %v325, %v332
    %v349 = vadd.f32 %v326, %v332
    %350 = vst [vmem:[%s3] sm:$0xff] %v334
    %351 = vst [vmem:[%s3 + $0x8] sm:$0xff] %v335
    %352 = vst [vmem:[%s3 + $0x10] sm:$0xff] %v336
    %353 = vst [vmem:[%s3 + $0x18] sm:$0xff] %v337
    %354 = vst [vmem:[%s3 + $0x20] sm:$0xff] %v338
    %355 = vst [vmem:[%s3 + $0x28] sm:$0xff] %v339
    %356 = vst [vmem:[%s3 + $0x30] sm:$0xff] %v340
    %357 = vst [vmem:[%s3 + $0x38] sm:$0xff] %v341
    %358 = vst [vmem:[%s3 + $0x40] sm:$0xff] %v342
    %359 = vst [vmem:[%s3 + $0x48] sm:$0xff] %v343
    %360 = vst [vmem:[%s3 + $0x50] sm:$0xff] %v344
    %361 = vst [vmem:[%s3 + $0x58] sm:$0xff] %v345
    %362 = vst [vmem:[%s3 + $0x60] sm:$0xff] %v346
    %363 = vst [vmem:[%s3 + $0x68] sm:$0xff] %v347
    %364 = vst [vmem:[%s3 + $0x70] sm:$0xff] %v348
    %365 = vst [vmem:[%s3 + $0x78] sm:$0xff] %v349
  $region21: #{gcn_forward.5} parent=0 // pred_fallthru
    _
  // Predicated region
  $region22: #{gcn_forward.5} parent=0 // pred_check
    _
  $region23: #{gcn_forward.5} parent=0 // pred_check_branch
    %367 = sbr.rel (0) target = $region25
  $region24: #{gcn_forward.5} parent=0 // pred_region
    _
  $region25: #{gcn_forward.5} parent=0 // pred_fallthru
    _
  // Predicated region
  $region26: #{gcn_forward.5} parent=0 // pred_check
    _
  $region27: #{gcn_forward.5} parent=0 // pred_check_branch
    %369 = sbr.rel (0) target = $region29
  $region28: #{gcn_forward.5} parent=0 // pred_region
    _
  $region29: #{gcn_forward.5} parent=0 // pred_fallthru
    _

// kernel: gcn_forward.4
$region0: #{gcn_forward.4}
  #allocation0 [shape = 'u32[]', space=smem, size = 0x4, offset = 0x4, fixed_abs, tag = 'smem constant byte address 0x4 - core index']
  #allocation1 [shape = 'u32[144,128]{1,0:T(1,128)}', space=vmem, size = 0x12000, scoped, tag = 'internal scratch']
  #allocation2 [shape = 'f32[128,128]{1,0:T(8,128)}', space=vmem, size = 0x10000, scoped, tag = 'scratch operand']
  %s0 = inlined_call_operand.vmem [shape: bf16[128,128], index: 0, kind: input, shape index: {}]
  %s1 = inlined_call_operand.vmem [shape: bf16[128,128], index: 1, kind: input, shape index: {}]
  %s2 = inlined_call_operand.vmem [shape: f32[1,128], index: 2, kind: input, shape index: {}]
  %s3 = inlined_call_operand.vmem [shape: bf16[128,128], index: 3, kind: input, shape index: {}]
  %s4 = inlined_call_operand.vmem [shape: bf16[128,128], index: 4, kind: output, shape index: {}]
  %s5 = sld [smem:[#allocation0]]
  $region34: #{gcn_forward.4} parent=0
    _
  %s7 = ssub.s32 1, %s5
  %s8 = scalar_select 0, %s7, %s5
  // Predicated region
  $region2: #{gcn_forward.4} parent=0 // pred_check
    _
  $region3: #{gcn_forward.4} parent=0 // pred_check_branch
    %10 = sbr.rel (0) target = $region5
  $region4: #{gcn_forward.4} parent=0 // pred_region
    _
  $region5: #{gcn_forward.4} parent=0 // pred_fallthru
    _
  // Predicated region
  $region6: #{gcn_forward.4} parent=0 // pred_check
    _
  $region7: #{gcn_forward.4} parent=0 // pred_check_branch
    %12 = sbr.rel (0) target = $region9
  $region8: #{gcn_forward.4} parent=0 // pred_region
    _
  $region9: #{gcn_forward.4} parent=0 // pred_fallthru
    _
  // Predicated region
  $region10: #{gcn_forward.4} parent=0 // pred_check
    _
  $region11: #{gcn_forward.4} parent=0 // pred_check_branch
    %14 = sbr.rel (0) target = $region13
  $region12: #{gcn_forward.4} parent=0 // pred_region
    _
  $region13: #{gcn_forward.4} parent=0 // pred_fallthru
    _
  // Predicated region
  $region14: #{gcn_forward.4} parent=0 // pred_check
    _
  $region15: #{gcn_forward.4} parent=0 // pred_check_branch
    %16 = sbr.rel (0) target = $region17
  $region16: #{gcn_forward.4} parent=0 // pred_region
    _
  $region17: #{gcn_forward.4} parent=0 // pred_fallthru
    _
  %p18 = scmp.eq.s32.totalorder 0, 0
  // Predicated region
  $region18: #{gcn_forward.4} parent=0 // pred_check
    %p19 = pneg %p18
  $region19: #{gcn_forward.4} parent=0 // pred_check_branch
    %21 = sbr.rel (%p19) target = $region21
  $region20: #{gcn_forward.4} parent=0 // pred_region
    %22 = vst [vmem:[#allocation2] sm:$0xff] 0.0
    %23 = vst [vmem:[#allocation2 + $0x8] sm:$0xff] 0.0
    %24 = vst [vmem:[#allocation2 + $0x10] sm:$0xff] 0.0
    %25 = vst [vmem:[#allocation2 + $0x18] sm:$0xff] 0.0
    %26 = vst [vmem:[#allocation2 + $0x20] sm:$0xff] 0.0
    %27 = vst [vmem:[#allocation2 + $0x28] sm:$0xff] 0.0
    %28 = vst [vmem:[#allocation2 + $0x30] sm:$0xff] 0.0
    %29 = vst [vmem:[#allocation2 + $0x38] sm:$0xff] 0.0
    %30 = vst [vmem:[#allocation2 + $0x40] sm:$0xff] 0.0
    %31 = vst [vmem:[#allocation2 + $0x48] sm:$0xff] 0.0
    %32 = vst [vmem:[#allocation2 + $0x50] sm:$0xff] 0.0
    %33 = vst [vmem:[#allocation2 + $0x58] sm:$0xff] 0.0
    %34 = vst [vmem:[#allocation2 + $0x60] sm:$0xff] 0.0
    %35 = vst [vmem:[#allocation2 + $0x68] sm:$0xff] 0.0
    %36 = vst [vmem:[#allocation2 + $0x70] sm:$0xff] 0.0
    %37 = vst [vmem:[#allocation2 + $0x78] sm:$0xff] 0.0
  $region21: #{gcn_forward.4} parent=0 // pred_fallthru
    _
  %v38 = vld [vmem:[#allocation2] sm:$0xff]
  %v39 = vld [vmem:[#allocation2 + $0x8] sm:$0xff]
  %v40 = vld [vmem:[#allocation2 + $0x10] sm:$0xff]
  %v41 = vld [vmem:[#allocation2 + $0x18] sm:$0xff]
  %v42 = vld [vmem:[#allocation2 + $0x20] sm:$0xff]
  %v43 = vld [vmem:[#allocation2 + $0x28] sm:$0xff]
  %v44 = vld [vmem:[#allocation2 + $0x30] sm:$0xff]
  %v45 = vld [vmem:[#allocation2 + $0x38] sm:$0xff]
  %v46 = vld [vmem:[#allocation2 + $0x40] sm:$0xff]
  %v47 = vld [vmem:[#allocation2 + $0x48] sm:$0xff]
  %v48 = vld [vmem:[#allocation2 + $0x50] sm:$0xff]
  %v49 = vld [vmem:[#allocation2 + $0x58] sm:$0xff]
  %v50 = vld [vmem:[#allocation2 + $0x60] sm:$0xff]
  %v51 = vld [vmem:[#allocation2 + $0x68] sm:$0xff]
  %v52 = vld [vmem:[#allocation2 + $0x70] sm:$0xff]
  %v53 = vld [vmem:[#allocation2 + $0x78] sm:$0xff]
  %v54 = vld [vmem:[%s0] sm:$0xf]
  %v55 = vld [vmem:[%s0 + $0x4] sm:$0xf]
  %v56 = vld [vmem:[%s0 + $0x8] sm:$0xf]
  %v57 = vld [vmem:[%s0 + $0xc] sm:$0xf]
  %v58 = vld [vmem:[%s0 + $0x10] sm:$0xf]
  %v59 = vld [vmem:[%s0 + $0x14] sm:$0xf]
  %v60 = vld [vmem:[%s0 + $0x18] sm:$0xf]
  %v61 = vld [vmem:[%s0 + $0x1c] sm:$0xf]
  %v62 = vld [vmem:[%s0 + $0x20] sm:$0xf]
  %v63 = vld [vmem:[%s0 + $0x24] sm:$0xf]
  %v64 = vld [vmem:[%s0 + $0x28] sm:$0xf]
  %v65 = vld [vmem:[%s0 + $0x2c] sm:$0xf]
  %v66 = vld [vmem:[%s0 + $0x30] sm:$0xf]
  %v67 = vld [vmem:[%s0 + $0x34] sm:$0xf]
  %v68 = vld [vmem:[%s0 + $0x38] sm:$0xf]
  %v69 = vld [vmem:[%s0 + $0x3c] sm:$0xf]
  %v70 = vld [vmem:[%s1] sm:$0xf]
  %v71 = vld [vmem:[%s1 + $0x4] sm:$0xf]
  %v72 = vld [vmem:[%s1 + $0x8] sm:$0xf]
  %v73 = vld [vmem:[%s1 + $0xc] sm:$0xf]
  %v74 = vld [vmem:[%s1 + $0x10] sm:$0xf]
  %v75 = vld [vmem:[%s1 + $0x14] sm:$0xf]
  %v76 = vld [vmem:[%s1 + $0x18] sm:$0xf]
  %v77 = vld [vmem:[%s1 + $0x1c] sm:$0xf]
  %v78 = vld [vmem:[%s1 + $0x20] sm:$0xf]
  %v79 = vld [vmem:[%s1 + $0x24] sm:$0xf]
  %v80 = vld [vmem:[%s1 + $0x28] sm:$0xf]
  %v81 = vld [vmem:[%s1 + $0x2c] sm:$0xf]
  %v82 = vld [vmem:[%s1 + $0x30] sm:$0xf]
  %v83 = vld [vmem:[%s1 + $0x34] sm:$0xf]
  %v84 = vld [vmem:[%s1 + $0x38] sm:$0xf]
  %v85 = vld [vmem:[%s1 + $0x3c] sm:$0xf]
  %v102 = vunpack.c.l.b16 %v54
  %v103 = vunpack.c.l.b16 %v55
  %v104 = vunpack.c.l.b16 %v56
  %v105 = vunpack.c.l.b16 %v57
  %v106 = vunpack.c.l.b16 %v58
  %v107 = vunpack.c.l.b16 %v59
  %v108 = vunpack.c.l.b16 %v60
  %v109 = vunpack.c.l.b16 %v61
  %v110 = vunpack.c.l.b16 %v62
  %v111 = vunpack.c.l.b16 %v63
  %v112 = vunpack.c.l.b16 %v64
  %v113 = vunpack.c.l.b16 %v65
  %v114 = vunpack.c.l.b16 %v66
  %v115 = vunpack.c.l.b16 %v67
  %v116 = vunpack.c.l.b16 %v68
  %v117 = vunpack.c.l.b16 %v69
  %v118 = vpack.c.b16 %v103, %v102
  %v119 = vpack.c.b16 %v105, %v104
  %v120 = vpack.c.b16 %v107, %v106
  %v121 = vpack.c.b16 %v109, %v108
  %v122 = vpack.c.b16 %v111, %v110
  %v123 = vpack.c.b16 %v113, %v112
  %v124 = vpack.c.b16 %v115, %v114
  %v125 = vpack.c.b16 %v117, %v116
  %v150 = vunpack.c.l.b16 %v70
  %v151 = vunpack.c.l.b16 %v71
  %v152 = vunpack.c.l.b16 %v72
  %v153 = vunpack.c.l.b16 %v73
  %v154 = vunpack.c.l.b16 %v74
  %v155 = vunpack.c.l.b16 %v75
  %v156 = vunpack.c.l.b16 %v76
  %v157 = vunpack.c.l.b16 %v77
  %v158 = vunpack.c.l.b16 %v78
  %v159 = vunpack.c.l.b16 %v79
  %v160 = vunpack.c.l.b16 %v80
  %v161 = vunpack.c.l.b16 %v81
  %v162 = vunpack.c.l.b16 %v82
  %v163 = vunpack.c.l.b16 %v83
  %v164 = vunpack.c.l.b16 %v84
  %v165 = vunpack.c.l.b16 %v85
  %v166 = vpack.c.b16 %v151, %v150
  %v167 = vpack.c.b16 %v153, %v152
  %v168 = vpack.c.b16 %v155, %v154
  %v169 = vpack.c.b16 %v157, %v156
  %v170 = vpack.c.b16 %v159, %v158
  %v171 = vpack.c.b16 %v161, %v160
  %v172 = vpack.c.b16 %v163, %v162
  %v173 = vpack.c.b16 %v165, %v164
  %182 = vmatprep.subr.bf16.mxu0 0
  %183 = vmatpush1.bf16.msra.mxu0 %v173
  %184 = vmatprep.subr.bf16.mxu0 0
  %185 = vmatpush1.bf16.msra.mxu0 %v172
  %186 = vmatprep.subr.bf16.mxu0 0
  %187 = vmatpush1.bf16.msra.mxu0 %v171
  %188 = vmatprep.subr.bf16.mxu0 0
  %189 = vmatpush1.bf16.msra.mxu0 %v170
  %190 = vmatprep.subr.bf16.mxu0 0
  %191 = vmatpush1.bf16.msra.mxu0 %v169
  %192 = vmatprep.subr.bf16.mxu0 0
  %193 = vmatpush1.bf16.msra.mxu0 %v168
  %194 = vmatprep.subr.bf16.mxu0 0
  %195 = vmatpush1.bf16.msra.mxu0 %v167
  %196 = vmatprep.subr.bf16.mxu0 0
  %197 = vmatpush1.bf16.msra.mxu0 %v166
  %198 = vmatprep.subr.bf16.mxu0 0
  %199 = vmatpush2.bf16.msra.mxu0 0
  %200 = vmatprep.subr.bf16.mxu0 0
  %201 = vmatpush2.bf16.msra.mxu0 0
  %202 = vmatprep.subr.bf16.mxu0 0
  %203 = vmatpush2.bf16.msra.mxu0 0
  %204 = vmatprep.subr.bf16.mxu0 0
  %205 = vmatpush2.bf16.msra.mxu0 0
  %206 = vmatprep.subr.bf16.mxu0 0
  %207 = vmatpush2.bf16.msra.mxu0 0
  %208 = vmatprep.subr.bf16.mxu0 0
  %209 = vmatpush2.bf16.msra.mxu0 0
  %210 = vmatprep.subr.bf16.mxu0 0
  %211 = vmatpush2.bf16.msra.mxu0 0
  %212 = vmatprep.subr.bf16.mxu0 0
  %213 = vmatpush2.bf16.msra.mxu0 0
  %214 = vmatprep.mubr.bf16.mxu0 0
  %215 = vmatmul.mubr.bf16.gmra.mxu0 %v118
  %v216 = vpop.f32.mrf.mxu0
  %v217 = vadd.f32 0.0, %v216
  %v218 = vpop.f32.mrf.mxu0
  %v219 = vpop.f32.mrf.mxu0
  %v220 = vadd.f32 0.0, %v219
  %v221 = vpop.f32.mrf.mxu0
  %222 = vmatprep.mubr.bf16.mxu0 0
  %223 = vmatmul.mubr.bf16.gmra.mxu0 %v119
  %v224 = vpop.f32.mrf.mxu0
  %v225 = vadd.f32 0.0, %v224
  %v226 = vpop.f32.mrf.mxu0
  %v227 = vpop.f32.mrf.mxu0
  %v228 = vadd.f32 0.0, %v227
  %v229 = vpop.f32.mrf.mxu0
  %230 = vmatprep.mubr.bf16.mxu0 0
  %231 = vmatmul.mubr.bf16.gmra.mxu0 %v120
  %v232 = vpop.f32.mrf.mxu0
  %v233 = vadd.f32 0.0, %v232
  %v234 = vpop.f32.mrf.mxu0
  %v235 = vpop.f32.mrf.mxu0
  %v236 = vadd.f32 0.0, %v235
  %v237 = vpop.f32.mrf.mxu0
  %238 = vmatprep.mubr.bf16.mxu0 0
  %239 = vmatmul.mubr.bf16.gmra.mxu0 %v121
  %v240 = vpop.f32.mrf.mxu0
  %v241 = vadd.f32 0.0, %v240
  %v242 = vpop.f32.mrf.mxu0
  %v243 = vpop.f32.mrf.mxu0
  %v244 = vadd.f32 0.0, %v243
  %v245 = vpop.f32.mrf.mxu0
  %246 = vmatprep.mubr.bf16.mxu0 0
  %247 = vmatmul.mubr.bf16.gmra.mxu0 %v122
  %v248 = vpop.f32.mrf.mxu0
  %v249 = vadd.f32 0.0, %v248
  %v250 = vpop.f32.mrf.mxu0
  %v251 = vpop.f32.mrf.mxu0
  %v252 = vadd.f32 0.0, %v251
  %v253 = vpop.f32.mrf.mxu0
  %254 = vmatprep.mubr.bf16.mxu0 0
  %255 = vmatmul.mubr.bf16.gmra.mxu0 %v123
  %v256 = vpop.f32.mrf.mxu0
  %v257 = vadd.f32 0.0, %v256
  %v258 = vpop.f32.mrf.mxu0
  %v259 = vpop.f32.mrf.mxu0
  %v260 = vadd.f32 0.0, %v259
  %v261 = vpop.f32.mrf.mxu0
  %262 = vmatprep.mubr.bf16.mxu0 0
  %263 = vmatmul.mubr.bf16.gmra.mxu0 %v124
  %v264 = vpop.f32.mrf.mxu0
  %v265 = vadd.f32 0.0, %v264
  %v266 = vpop.f32.mrf.mxu0
  %v267 = vpop.f32.mrf.mxu0
  %v268 = vadd.f32 0.0, %v267
  %v269 = vpop.f32.mrf.mxu0
  %270 = vmatprep.mubr.bf16.mxu0 0
  %271 = vmatmul.mubr.bf16.gmra.mxu0 %v125
  %v272 = vpop.f32.mrf.mxu0
  %v273 = vadd.f32 0.0, %v272
  %v274 = vpop.f32.mrf.mxu0
  %v275 = vpop.f32.mrf.mxu0
  %v276 = vadd.f32 0.0, %v275
  %v277 = vpop.f32.mrf.mxu0
  %278 = vdwg.mxu0
  %v279 = vadd.f32 %v38, %v217
  %v280 = vadd.f32 %v39, %v220
  %v281 = vadd.f32 %v40, %v225
  %v282 = vadd.f32 %v41, %v228
  %v283 = vadd.f32 %v42, %v233
  %v284 = vadd.f32 %v43, %v236
  %v285 = vadd.f32 %v44, %v241
  %v286 = vadd.f32 %v45, %v244
  %v287 = vadd.f32 %v46, %v249
  %v288 = vadd.f32 %v47, %v252
  %v289 = vadd.f32 %v48, %v257
  %v290 = vadd.f32 %v49, %v260
  %v291 = vadd.f32 %v50, %v265
  %v292 = vadd.f32 %v51, %v268
  %v293 = vadd.f32 %v52, %v273
  %v294 = vadd.f32 %v53, %v276
  %295 = vst [vmem:[#allocation2] sm:$0xff] %v279
  %296 = vst [vmem:[#allocation2 + $0x8] sm:$0xff] %v280
  %297 = vst [vmem:[#allocation2 + $0x10] sm:$0xff] %v281
  %298 = vst [vmem:[#allocation2 + $0x18] sm:$0xff] %v282
  %299 = vst [vmem:[#allocation2 + $0x20] sm:$0xff] %v283
  %300 = vst [vmem:[#allocation2 + $0x28] sm:$0xff] %v284
  %301 = vst [vmem:[#allocation2 + $0x30] sm:$0xff] %v285
  %302 = vst [vmem:[#allocation2 + $0x38] sm:$0xff] %v286
  %303 = vst [vmem:[#allocation2 + $0x40] sm:$0xff] %v287
  %304 = vst [vmem:[#allocation2 + $0x48] sm:$0xff] %v288
  %305 = vst [vmem:[#allocation2 + $0x50] sm:$0xff] %v289
  %306 = vst [vmem:[#allocation2 + $0x58] sm:$0xff] %v290
  %307 = vst [vmem:[#allocation2 + $0x60] sm:$0xff] %v291
  %308 = vst [vmem:[#allocation2 + $0x68] sm:$0xff] %v292
  %309 = vst [vmem:[#allocation2 + $0x70] sm:$0xff] %v293
  %310 = vst [vmem:[#allocation2 + $0x78] sm:$0xff] %v294
  // Predicated region
  $region22: #{gcn_forward.4} parent=0 // pred_check
    %p311 = pneg %p18
  $region23: #{gcn_forward.4} parent=0 // pred_check_branch
    %313 = sbr.rel (%p311) target = $region25
  $region24: #{gcn_forward.4} parent=0 // pred_region
    %v314 = vld [vmem:[#allocation2] sm:$0xff]
    %v315 = vld [vmem:[#allocation2 + $0x8] sm:$0xff]
    %v316 = vld [vmem:[#allocation2 + $0x10] sm:$0xff]
    %v317 = vld [vmem:[#allocation2 + $0x18] sm:$0xff]
    %v318 = vld [vmem:[#allocation2 + $0x20] sm:$0xff]
    %v319 = vld [vmem:[#allocation2 + $0x28] sm:$0xff]
    %v320 = vld [vmem:[#allocation2 + $0x30] sm:$0xff]
    %v321 = vld [vmem:[#allocation2 + $0x38] sm:$0xff]
    %v322 = vld [vmem:[#allocation2 + $0x40] sm:$0xff]
    %v323 = vld [vmem:[#allocation2 + $0x48] sm:$0xff]
    %v324 = vld [vmem:[#allocation2 + $0x50] sm:$0xff]
    %v325 = vld [vmem:[#allocation2 + $0x58] sm:$0xff]
    %v326 = vld [vmem:[#allocation2 + $0x60] sm:$0xff]
    %v327 = vld [vmem:[#allocation2 + $0x68] sm:$0xff]
    %v328 = vld [vmem:[#allocation2 + $0x70] sm:$0xff]
    %v329 = vld [vmem:[#allocation2 + $0x78] sm:$0xff]
    %v330 = vld [vmem:[%s2] sm:$0x1]
    %v332 = vlaneseq
    %v333 = vshrl.u32 %v332, 7
    %v334 = vsub.s32 0, %v333
    %v335 = vrot.slane %v330, %v334
    %v337 = vadd.f32 %v314, %v335
    %v338 = vadd.f32 %v315, %v335
    %v339 = vadd.f32 %v316, %v335
    %v340 = vadd.f32 %v317, %v335
    %v341 = vadd.f32 %v318, %v335
    %v342 = vadd.f32 %v319, %v335
    %v343 = vadd.f32 %v320, %v335
    %v344 = vadd.f32 %v321, %v335
    %v345 = vadd.f32 %v322, %v335
    %v346 = vadd.f32 %v323, %v335
    %v347 = vadd.f32 %v324, %v335
    %v348 = vadd.f32 %v325, %v335
    %v349 = vadd.f32 %v326, %v335
    %v350 = vadd.f32 %v327, %v335
    %v351 = vadd.f32 %v328, %v335
    %v352 = vadd.f32 %v329, %v335
    %v353 = vmax.f32 %v337, 0.0
    %v354 = vmax.f32 %v338, 0.0
    %v355 = vmax.f32 %v339, 0.0
    %v356 = vmax.f32 %v340, 0.0
    %v357 = vmax.f32 %v341, 0.0
    %v358 = vmax.f32 %v342, 0.0
    %v359 = vmax.f32 %v343, 0.0
    %v360 = vmax.f32 %v344, 0.0
    %v361 = vmax.f32 %v345, 0.0
    %v362 = vmax.f32 %v346, 0.0
    %v363 = vmax.f32 %v347, 0.0
    %v364 = vmax.f32 %v348, 0.0
    %v365 = vmax.f32 %v349, 0.0
    %v366 = vmax.f32 %v350, 0.0
    %v367 = vmax.f32 %v351, 0.0
    %v368 = vmax.f32 %v352, 0.0
    %v369 = vpack.c.bf16 %v354, %v353
    %v370 = vpack.c.bf16 %v356, %v355
    %v371 = vpack.c.bf16 %v358, %v357
    %v372 = vpack.c.bf16 %v360, %v359
    %v373 = vpack.c.bf16 %v362, %v361
    %v374 = vpack.c.bf16 %v364, %v363
    %v375 = vpack.c.bf16 %v366, %v365
    %v376 = vpack.c.bf16 %v368, %v367
    %v377 = vld [vmem:[%s3] sm:$0xf]
    %v378 = vld [vmem:[%s3 + $0x4] sm:$0xf]
    %v379 = vld [vmem:[%s3 + $0x8] sm:$0xf]
    %v380 = vld [vmem:[%s3 + $0xc] sm:$0xf]
    %v381 = vld [vmem:[%s3 + $0x10] sm:$0xf]
    %v382 = vld [vmem:[%s3 + $0x14] sm:$0xf]
    %v383 = vld [vmem:[%s3 + $0x18] sm:$0xf]
    %v384 = vld [vmem:[%s3 + $0x1c] sm:$0xf]
    %v385 = vld [vmem:[%s3 + $0x20] sm:$0xf]
    %v386 = vld [vmem:[%s3 + $0x24] sm:$0xf]
    %v387 = vld [vmem:[%s3 + $0x28] sm:$0xf]
    %v388 = vld [vmem:[%s3 + $0x2c] sm:$0xf]
    %v389 = vld [vmem:[%s3 + $0x30] sm:$0xf]
    %v390 = vld [vmem:[%s3 + $0x34] sm:$0xf]
    %v391 = vld [vmem:[%s3 + $0x38] sm:$0xf]
    %v392 = vld [vmem:[%s3 + $0x3c] sm:$0xf]
    %v409 = vunpack.c.l.b16 %v377
    %v410 = vunpack.c.l.b16 %v378
    %v411 = vunpack.c.l.b16 %v379
    %v412 = vunpack.c.l.b16 %v380
    %v413 = vunpack.c.l.b16 %v381
    %v414 = vunpack.c.l.b16 %v382
    %v415 = vunpack.c.l.b16 %v383
    %v416 = vunpack.c.l.b16 %v384
    %v417 = vunpack.c.l.b16 %v385
    %v418 = vunpack.c.l.b16 %v386
    %v419 = vunpack.c.l.b16 %v387
    %v420 = vunpack.c.l.b16 %v388
    %v421 = vunpack.c.l.b16 %v389
    %v422 = vunpack.c.l.b16 %v390
    %v423 = vunpack.c.l.b16 %v391
    %v424 = vunpack.c.l.b16 %v392
    %v425 = vpack.c.b16 %v410, %v409
    %v426 = vpack.c.b16 %v412, %v411
    %v427 = vpack.c.b16 %v414, %v413
    %v428 = vpack.c.b16 %v416, %v415
    %v429 = vpack.c.b16 %v418, %v417
    %v430 = vpack.c.b16 %v420, %v419
    %v431 = vpack.c.b16 %v422, %v421
    %v432 = vpack.c.b16 %v424, %v423
    %441 = vmatprep.subr.bf16.mxu0 0
    %442 = vmatpush1.bf16.msra.mxu0 %v432
    %443 = vmatprep.subr.bf16.mxu0 0
    %444 = vmatpush1.bf16.msra.mxu0 %v431
    %445 = vmatprep.subr.bf16.mxu0 0
    %446 = vmatpush1.bf16.msra.mxu0 %v430
    %447 = vmatprep.subr.bf16.mxu0 0
    %448 = vmatpush1.bf16.msra.mxu0 %v429
    %449 = vmatprep.subr.bf16.mxu0 0
    %450 = vmatpush1.bf16.msra.mxu0 %v428
    %451 = vmatprep.subr.bf16.mxu0 0
    %452 = vmatpush1.bf16.msra.mxu0 %v427
    %453 = vmatprep.subr.bf16.mxu0 0
    %454 = vmatpush1.bf16.msra.mxu0 %v426
    %455 = vmatprep.subr.bf16.mxu0 0
    %456 = vmatpush1.bf16.msra.mxu0 %v425
    %457 = vmatprep.subr.bf16.mxu0 0
    %458 = vmatpush2.bf16.msra.mxu0 0
    %459 = vmatprep.subr.bf16.mxu0 0
    %460 = vmatpush2.bf16.msra.mxu0 0
    %461 = vmatprep.subr.bf16.mxu0 0
    %462 = vmatpush2.bf16.msra.mxu0 0
    %463 = vmatprep.subr.bf16.mxu0 0
    %464 = vmatpush2.bf16.msra.mxu0 0
    %465 = vmatprep.subr.bf16.mxu0 0
    %466 = vmatpush2.bf16.msra.mxu0 0
    %467 = vmatprep.subr.bf16.mxu0 0
    %468 = vmatpush2.bf16.msra.mxu0 0
    %469 = vmatprep.subr.bf16.mxu0 0
    %470 = vmatpush2.bf16.msra.mxu0 0
    %471 = vmatprep.subr.bf16.mxu0 0
    %472 = vmatpush2.bf16.msra.mxu0 0
    %473 = vmatprep.mubr.bf16.mxu0 0
    %474 = vmatmul.mubr.bf16.gmra.mxu0 %v369
    %v475 = vpop.f32.mrf.mxu0
    %v476 = vadd.f32 0.0, %v475
    %v477 = vpop.f32.mrf.mxu0
    %v478 = vpop.f32.mrf.mxu0
    %v479 = vadd.f32 0.0, %v478
    %v480 = vpop.f32.mrf.mxu0
    %481 = vmatprep.mubr.bf16.mxu0 0
    %482 = vmatmul.mubr.bf16.gmra.mxu0 %v370
    %v483 = vpop.f32.mrf.mxu0
    %v484 = vadd.f32 0.0, %v483
    %v485 = vpop.f32.mrf.mxu0
    %v486 = vpop.f32.mrf.mxu0
    %v487 = vadd.f32 0.0, %v486
    %v488 = vpop.f32.mrf.mxu0
    %489 = vmatprep.mubr.bf16.mxu0 0
    %490 = vmatmul.mubr.bf16.gmra.mxu0 %v371
    %v491 = vpop.f32.mrf.mxu0
    %v492 = vadd.f32 0.0, %v491
    %v493 = vpop.f32.mrf.mxu0
    %v494 = vpop.f32.mrf.mxu0
    %v495 = vadd.f32 0.0, %v494
    %v496 = vpop.f32.mrf.mxu0
    %497 = vmatprep.mubr.bf16.mxu0 0
    %498 = vmatmul.mubr.bf16.gmra.mxu0 %v372
    %v499 = vpop.f32.mrf.mxu0
    %v500 = vadd.f32 0.0, %v499
    %v501 = vpop.f32.mrf.mxu0
    %v502 = vpop.f32.mrf.mxu0
    %v503 = vadd.f32 0.0, %v502
    %v504 = vpop.f32.mrf.mxu0
    %505 = vmatprep.mubr.bf16.mxu0 0
    %506 = vmatmul.mubr.bf16.gmra.mxu0 %v373
    %v507 = vpop.f32.mrf.mxu0
    %v508 = vadd.f32 0.0, %v507
    %v509 = vpop.f32.mrf.mxu0
    %v510 = vpop.f32.mrf.mxu0
    %v511 = vadd.f32 0.0, %v510
    %v512 = vpop.f32.mrf.mxu0
    %513 = vmatprep.mubr.bf16.mxu0 0
    %514 = vmatmul.mubr.bf16.gmra.mxu0 %v374
    %v515 = vpop.f32.mrf.mxu0
    %v516 = vadd.f32 0.0, %v515
    %v517 = vpop.f32.mrf.mxu0
    %v518 = vpop.f32.mrf.mxu0
    %v519 = vadd.f32 0.0, %v518
    %v520 = vpop.f32.mrf.mxu0
    %521 = vmatprep.mubr.bf16.mxu0 0
    %522 = vmatmul.mubr.bf16.gmra.mxu0 %v375
    %v523 = vpop.f32.mrf.mxu0
    %v524 = vadd.f32 0.0, %v523
    %v525 = vpop.f32.mrf.mxu0
    %v526 = vpop.f32.mrf.mxu0
    %v527 = vadd.f32 0.0, %v526
    %v528 = vpop.f32.mrf.mxu0
    %529 = vmatprep.mubr.bf16.mxu0 0
    %530 = vmatmul.mubr.bf16.gmra.mxu0 %v376
    %v531 = vpop.f32.mrf.mxu0
    %v532 = vadd.f32 0.0, %v531
    %v533 = vpop.f32.mrf.mxu0
    %v534 = vpop.f32.mrf.mxu0
    %v535 = vadd.f32 0.0, %v534
    %v536 = vpop.f32.mrf.mxu0
    %537 = vdwg.mxu0
    %v538 = vpack.c.bf16 %v479, %v476
    %v539 = vpack.c.bf16 %v487, %v484
    %v540 = vpack.c.bf16 %v495, %v492
    %v541 = vpack.c.bf16 %v503, %v500
    %v542 = vpack.c.bf16 %v511, %v508
    %v543 = vpack.c.bf16 %v519, %v516
    %v544 = vpack.c.bf16 %v527, %v524
    %v545 = vpack.c.bf16 %v535, %v532
    %v554 = vunpack.c.l.b16 %v538
    %v555 = vunpack.c.h.b16 %v538
    %v556 = vunpack.c.l.b16 %v539
    %v557 = vunpack.c.h.b16 %v539
    %v558 = vunpack.c.l.b16 %v540
    %v559 = vunpack.c.h.b16 %v540
    %v560 = vunpack.c.l.b16 %v541
    %v561 = vunpack.c.h.b16 %v541
    %v562 = vunpack.c.l.b16 %v542
    %v563 = vunpack.c.h.b16 %v542
    %v564 = vunpack.c.l.b16 %v543
    %v565 = vunpack.c.h.b16 %v543
    %v566 = vunpack.c.l.b16 %v544
    %v567 = vunpack.c.h.b16 %v544
    %v568 = vunpack.c.l.b16 %v545
    %v569 = vunpack.c.h.b16 %v545
    %v570 = vpack.c.b16 %v554, %v554
    %v571 = vpack.c.b16 %v555, %v555
    %v572 = vpack.c.b16 %v556, %v556
    %v573 = vpack.c.b16 %v557, %v557
    %v574 = vpack.c.b16 %v558, %v558
    %v575 = vpack.c.b16 %v559, %v559
    %v576 = vpack.c.b16 %v560, %v560
    %v577 = vpack.c.b16 %v561, %v561
    %v578 = vpack.c.b16 %v562, %v562
    %v579 = vpack.c.b16 %v563, %v563
    %v580 = vpack.c.b16 %v564, %v564
    %v581 = vpack.c.b16 %v565, %v565
    %v582 = vpack.c.b16 %v566, %v566
    %v583 = vpack.c.b16 %v567, %v567
    %v584 = vpack.c.b16 %v568, %v568
    %v585 = vpack.c.b16 %v569, %v569
    %602 = vst [vmem:[%s4] sm:$0xf] %v570
    %603 = vst [vmem:[%s4 + $0x4] sm:$0xf] %v571
    %604 = vst [vmem:[%s4 + $0x8] sm:$0xf] %v572
    %605 = vst [vmem:[%s4 + $0xc] sm:$0xf] %v573
    %606 = vst [vmem:[%s4 + $0x10] sm:$0xf] %v574
    %607 = vst [vmem:[%s4 + $0x14] sm:$0xf] %v575
    %608 = vst [vmem:[%s4 + $0x18] sm:$0xf] %v576
    %609 = vst [vmem:[%s4 + $0x1c] sm:$0xf] %v577
    %610 = vst [vmem:[%s4 + $0x20] sm:$0xf] %v578
    %611 = vst [vmem:[%s4 + $0x24] sm:$0xf] %v579
    %612 = vst [vmem:[%s4 + $0x28] sm:$0xf] %v580
    %613 = vst [vmem:[%s4 + $0x2c] sm:$0xf] %v581
    %614 = vst [vmem:[%s4 + $0x30] sm:$0xf] %v582
    %615 = vst [vmem:[%s4 + $0x34] sm:$0xf] %v583
    %616 = vst [vmem:[%s4 + $0x38] sm:$0xf] %v584
    %617 = vst [vmem:[%s4 + $0x3c] sm:$0xf] %v585
  $region25: #{gcn_forward.4} parent=0 // pred_fallthru
    _
  // Predicated region
  $region26: #{gcn_forward.4} parent=0 // pred_check
    _
  $region27: #{gcn_forward.4} parent=0 // pred_check_branch
    %619 = sbr.rel (0) target = $region29
  $region28: #{gcn_forward.4} parent=0 // pred_region
    _
  $region29: #{gcn_forward.4} parent=0 // pred_fallthru
    _
  // Predicated region
  $region30: #{gcn_forward.4} parent=0 // pred_check
    _
  $region31: #{gcn_forward.4} parent=0 // pred_check_branch
    %621 = sbr.rel (0) target = $region33
  $region32: #{gcn_forward.4} parent=0 // pred_region
    _
  $region33: #{gcn_forward.4} parent=0 // pred_fallthru
    _

</llo_original>
